<compile_context>
chip_gen: v6e
topology: v6e:2x2x1
jax: 0.10.0
libtpu: 0.0.40
codegen_flags: <defaults>
</compile_context>

<pallas_src>
import jax
import jax.numpy as jnp
from jax.experimental import pallas as pl
from jax.experimental.pallas import tpu as pltpu

DIM = 32        # args.down_dim (downsample path; 768 for bert-base-uncased)
HID = 100       # decoder hidden size (logical, as in nn.Linear(dim*2, 100))
HID_PAD = 128   # lane-padded decoder hidden; zero padding preserves numerics
BATCH = 2
SEQ = 8


def fused_kernel(x_ref, resp_ref, wih_ref, whh_ref, bl_ref,
                 w1_ref, b1_ref, w2_ref, b2_ref, o_ref):
    """LSTM final hidden state + factored outer-product decoder + sigmoid.

    Shapes are per batch block (BB rows of the global batch):
      x_ref:   (BB*T, D)  dials, pre-flattened in the wrapper (b-major rows)
      resp_ref:(BB, 2D)   response
      wih_ref: (D, 4D)    input->gates weight (PyTorch W_ih transposed)
      whh_ref: (D, 4D)    hidden->gates weight (PyTorch W_hh transposed)
      bl_ref:  (1, 4D)    b_ih + b_hh
      w1_ref:  (2D, 128)  decoder layer 1, lane-padded from (2D, 100)
      b1_ref:  (1, 128)   lane-padded bias
      w2_ref:  (1, 128)   decoder layer 2 stored as a padded row vector
      b2_ref:  (1, 1)     decoder layer 2 bias
      o_ref:   (BB, D)    sigmoid(decoder(rep))[..., 0]  (lane-dense output)
    """
    BT, D = x_ref.shape
    B = o_ref.shape[0]
    T = BT // B

    # ---- Factored decoder layer 1 (independent of h). -----------------------
    # (rep @ W1)[b, d, :] == h[b, d] * (response @ W1)[b, :]; compute rr once.
    # No dependence on h => the scheduler can issue this MXU work under the
    # serial LSTM recurrence instead of after it.
    rr = jnp.dot(resp_ref[...], w1_ref[...],
                 preferred_element_type=jnp.float32)            # (BB, 128)

    # ---- Hoisted input projection: all timesteps in one MXU push. -----------
    xg = jnp.dot(x_ref[...], wih_ref[...],
                 preferred_element_type=jnp.float32) + bl_ref[...]
    xg = xg.reshape(B, T, 4 * D)       # layout-preserving relabel (T=8 tile)

    whh = whh_ref[...]
    h = jnp.zeros((B, D), jnp.float32)
    c = jnp.zeros((B, D), jnp.float32)

    # ---- Recurrence, fully unrolled (T is small & static). ------------------
    # Only h @ W_hh sits on the serial path; gate indices are all static.
    for t in range(T):
        gates = xg[:, t, :] + jnp.dot(h, whh, preferred_element_type=jnp.float32)
        sig = jax.nn.sigmoid(gates)        # one full-width (128-lane) EUP pass
        tnh = jnp.tanh(gates)              # one full-width (128-lane) EUP pass
        i_g = sig[:, 0 * D:1 * D]          # PyTorch gate order: i, f, g, o
        f_g = sig[:, 1 * D:2 * D]
        g_g = tnh[:, 2 * D:3 * D]
        o_g = sig[:, 3 * D:4 * D]
        c = f_g * c + i_g * g_g
        h = o_g * jnp.tanh(c)

    # ---- Factored decoder: scale rr by h, ReLU, lane-reduce final layer. ----
    h1 = jnp.maximum(h[:, :, None] * rr[:, None, :] + b1_ref[...], 0.0)  # (BB,D,128)
    out = jnp.sum(h1 * w2_ref[...], axis=-1) + b2_ref[...]               # (BB, D)
    o_ref[...] = jax.nn.sigmoid(out)


@jax.jit
def transition_predictor_cnn(dials, response, params):
    """dials: (B, T, D) f32; response: (B, 2D) f32 -> (B, D, 1) f32."""
    B, T, D = dials.shape

    # Batch-block grid: whole batch when small; sublane-aligned 8-row blocks on
    # a "parallel" axis when B is large (megacore sharding on v7x). At B=2 this
    # degenerates to grid=(1,) with trivial index maps.
    BB = B if (B <= 8 or B % 8 != 0) else 8
    nb = B // BB

    dials_flat = dials.reshape(B * T, D)   # flatten hoisted out of the kernel

    vmem = pltpu.MemorySpace.VMEM

    def full_spec(shape):
        return pl.BlockSpec(shape, lambda i: (0,) * len(shape), memory_space=vmem)

    flops = 2 * (B * T * D * 4 * D          # input projection
                 + T * B * D * 4 * D        # recurrent matmuls
                 + B * 2 * D * HID_PAD      # response @ W1
                 + B * D * HID_PAD)         # factored decoder mul + reduce
    transcendentals = B * T * (4 * D + 4 * D + D) + B * D
    bytes_accessed = 4 * (dials_flat.size + response.size + B * D
                          + sum(p.size for p in params.values()))

    out2d = pl.pallas_call(
        fused_kernel,
        out_shape=jax.ShapeDtypeStruct((B, D), jnp.float32),
        grid=(nb,),
        in_specs=[
            pl.BlockSpec((BB * T, D), lambda i: (i, 0), memory_space=vmem),
            pl.BlockSpec((BB, 2 * D), lambda i: (i, 0), memory_space=vmem),
            full_spec(params['w_ih'].shape),
            full_spec(params['w_hh'].shape),
            full_spec(params['b_lstm'].shape),
            full_spec(params['w1'].shape),
            full_spec(params['b1'].shape),
            full_spec(params['w2'].shape),
            full_spec(params['b2'].shape),
        ],
        out_specs=pl.BlockSpec((BB, D), lambda i: (i, 0), memory_space=vmem),
        compiler_params=pltpu.CompilerParams(
            dimension_semantics=("parallel",)),
        cost_estimate=pl.CostEstimate(
            flops=flops, transcendentals=transcendentals,
            bytes_accessed=bytes_accessed),
    )(dials_flat, response,
      params['w_ih'], params['w_hh'], params['b_lstm'],
      params['w1'], params['b1'], params['w2'], params['b2'])

    # Match nn.Linear(100, 1)'s trailing unit dim outside the kernel so the
    # in-kernel store stays lane-dense.
    return out2d[:, :, None]


def init_params(key):
    ks = jax.random.split(key, 8)
    u = lambda k, shp, sc: jax.random.uniform(k, shp, jnp.float32, -sc, sc)
    s_lstm = 1.0 / jnp.sqrt(jnp.float32(DIM))
    s_l1 = 1.0 / jnp.sqrt(jnp.float32(2 * DIM))
    s_l2 = 1.0 / jnp.sqrt(jnp.float32(HID))

    w1 = u(ks[4], (2 * DIM, HID), s_l1)
    b1 = u(ks[5], (1, HID), s_l1)
    w2 = u(ks[6], (HID, 1), s_l2)
    b2 = u(ks[7], (1, 1), s_l2)

    # Lane-pad the decoder once at init time (zero columns/rows -> exact
    # numerics: ReLU(0 + 0) * 0 contributes nothing).
    w1p = jnp.zeros((2 * DIM, HID_PAD), jnp.float32).at[:, :HID].set(w1)
    b1p = jnp.zeros((1, HID_PAD), jnp.float32).at[:, :HID].set(b1)
    w2p = jnp.zeros((1, HID_PAD), jnp.float32).at[:, :HID].set(w2[:, 0])

    return {
        'w_ih':   u(ks[0], (DIM, 4 * DIM), s_lstm),
        'w_hh':   u(ks[1], (DIM, 4 * DIM), s_lstm),
        # b_ih + b_hh folded, sampled as the sum of two independent uniforms
        # to match PyTorch's per-bias init distribution.
        'b_lstm': u(ks[2], (1, 4 * DIM), s_lstm) + u(ks[3], (1, 4 * DIM), s_lstm),
        'w1': w1p, 'b1': b1p, 'w2': w2p, 'b2': b2,
    }


if __name__ == "__main__":
    key = jax.random.PRNGKey(0)
    k_param, k_dials, k_resp = jax.random.split(key, 3)

    params = init_params(k_param)
    dials = jax.random.normal(k_dials, (BATCH, SEQ, DIM), jnp.float32)
    response = jax.random.normal(k_resp, (BATCH, 2 * DIM), jnp.float32)

    out = transition_predictor_cnn(dials, response, params)
    out = jax.block_until_ready(out)
    assert out.shape == (BATCH, DIM, 1), out.shape
    assert bool(jnp.all((out >= 0.0) & (out <= 1.0)))
    print("KERNEL_OK")
</pallas_src>

<mosaic_0001>
module attributes {stable_mosaic.version = 11 : i64} {
  func.func @fused_kernel(%arg0: i32, %arg1: memref<16x32xf32, #tpu.memory_space<vmem>>, %arg2: memref<2x64xf32, #tpu.memory_space<vmem>>, %arg3: memref<32x128xf32, #tpu.memory_space<vmem>>, %arg4: memref<32x128xf32, #tpu.memory_space<vmem>>, %arg5: memref<1x128xf32, #tpu.memory_space<vmem>>, %arg6: memref<64x128xf32, #tpu.memory_space<vmem>>, %arg7: memref<1x128xf32, #tpu.memory_space<vmem>>, %arg8: memref<1x128xf32, #tpu.memory_space<vmem>>, %arg9: memref<1x1xf32, #tpu.memory_space<vmem>>, %arg10: memref<2x32xf32, #tpu.memory_space<vmem>>) attributes {dimension_semantics = [#tpu.dimension_semantics<parallel>], iteration_bounds = array<i64: 1>, scalar_prefetch = 0 : i64, scratch_operands = 0 : i64, tpu.core_type = #tpu.core_type<tc>, window_params = [{transform_indices = @transform_0, window_bounds = array<i64: 16, 32>}, {transform_indices = @transform_1, window_bounds = array<i64: 2, 64>}, {pipeline_mode = #tpu.pipeline_mode<synchronous>, transform_indices = @transform_2, window_bounds = array<i64: 32, 128>}, {pipeline_mode = #tpu.pipeline_mode<synchronous>, transform_indices = @transform_3, window_bounds = array<i64: 32, 128>}, {pipeline_mode = #tpu.pipeline_mode<synchronous>, transform_indices = @transform_4, window_bounds = array<i64: 1, 128>}, {pipeline_mode = #tpu.pipeline_mode<synchronous>, transform_indices = @transform_5, window_bounds = array<i64: 64, 128>}, {pipeline_mode = #tpu.pipeline_mode<synchronous>, transform_indices = @transform_6, window_bounds = array<i64: 1, 128>}, {pipeline_mode = #tpu.pipeline_mode<synchronous>, transform_indices = @transform_7, window_bounds = array<i64: 1, 128>}, {pipeline_mode = #tpu.pipeline_mode<synchronous>, transform_indices = @transform_8, window_bounds = array<i64: 1, 1>}, {transform_indices = @transform_9, window_bounds = array<i64: 2, 32>}]} {
    %c0 = arith.constant 0 : index
    %c0_0 = arith.constant 0 : index
    %0 = vector.load %arg2[%c0, %c0_0] : memref<2x64xf32, #tpu.memory_space<vmem>>, vector<2x64xf32>
    %c0_1 = arith.constant 0 : index
    %c0_2 = arith.constant 0 : index
    %1 = vector.load %arg6[%c0_1, %c0_2] : memref<64x128xf32, #tpu.memory_space<vmem>>, vector<64x128xf32>
    %cst = arith.constant dense<0.000000e+00> : vector<2x128xf32>
    %2 = tpu.matmul %0, %1, %cst {dimension_numbers = #tpu.dot_dimension_numbers<[1], [0], [0], [1], [0, 0, 1, 1], [], []>} : vector<2x64xf32>, vector<64x128xf32>, vector<2x128xf32> -> vector<2x128xf32>
    %c0_3 = arith.constant 0 : index
    %c0_4 = arith.constant 0 : index
    %3 = vector.load %arg1[%c0_3, %c0_4] : memref<16x32xf32, #tpu.memory_space<vmem>>, vector<16x32xf32>
    %c0_5 = arith.constant 0 : index
    %c0_6 = arith.constant 0 : index
    %4 = vector.load %arg3[%c0_5, %c0_6] : memref<32x128xf32, #tpu.memory_space<vmem>>, vector<32x128xf32>
    %cst_7 = arith.constant dense<0.000000e+00> : vector<16x128xf32>
    %5 = tpu.matmul %3, %4, %cst_7 {dimension_numbers = #tpu.dot_dimension_numbers<[1], [0], [0], [1], [0, 0, 1, 1], [], []>} : vector<16x32xf32>, vector<32x128xf32>, vector<16x128xf32> -> vector<16x128xf32>
    %c0_8 = arith.constant 0 : index
    %c0_9 = arith.constant 0 : index
    %6 = vector.load %arg5[%c0_8, %c0_9] : memref<1x128xf32, #tpu.memory_space<vmem>>, vector<1x128xf32>
    %7 = vector.broadcast %6 : vector<1x128xf32> to vector<16x128xf32>
    %8 = arith.addf %5, %7 : vector<16x128xf32>
    %9 = vector.shape_cast %8 : vector<16x128xf32> to vector<2x8x128xf32>
    %c0_10 = arith.constant 0 : index
    %c0_11 = arith.constant 0 : index
    %10 = vector.load %arg4[%c0_10, %c0_11] : memref<32x128xf32, #tpu.memory_space<vmem>>, vector<32x128xf32>
    %cst_12 = arith.constant 0.000000e+00 : f32
    %11 = vector.broadcast %cst_12 : f32 to vector<2x32xf32>
    %cst_13 = arith.constant 0.000000e+00 : f32
    %12 = vector.broadcast %cst_13 : f32 to vector<2x32xf32>
    %13 = vector.extract_strided_slice %9 {offsets = [0, 0, 0], sizes = [2, 1, 128], strides = [1, 1, 1]} : vector<2x8x128xf32> to vector<2x1x128xf32>
    %14 = vector.shape_cast %13 : vector<2x1x128xf32> to vector<2x128xf32>
    %cst_14 = arith.constant dense<0.000000e+00> : vector<2x128xf32>
    %15 = tpu.matmul %11, %10, %cst_14 {dimension_numbers = #tpu.dot_dimension_numbers<[1], [0], [0], [1], [0, 0, 1, 1], [], []>} : vector<2x32xf32>, vector<32x128xf32>, vector<2x128xf32> -> vector<2x128xf32>
    %16 = arith.addf %14, %15 : vector<2x128xf32>
    %17 = arith.negf %16 : vector<2x128xf32>
    %18 = math.exp %17 : vector<2x128xf32>
    %cst_15 = arith.constant 1.000000e+00 : f32
    %19 = vector.broadcast %cst_15 : f32 to vector<2x128xf32>
    %20 = arith.addf %19, %18 : vector<2x128xf32>
    %21 = arith.divf %19, %20 : vector<2x128xf32>
    %22 = math.tanh %16 : vector<2x128xf32>
    %23 = vector.extract_strided_slice %21 {offsets = [0, 0], sizes = [2, 32], strides = [1, 1]} : vector<2x128xf32> to vector<2x32xf32>
    %24 = vector.extract_strided_slice %21 {offsets = [0, 32], sizes = [2, 32], strides = [1, 1]} : vector<2x128xf32> to vector<2x32xf32>
    %25 = vector.extract_strided_slice %22 {offsets = [0, 64], sizes = [2, 32], strides = [1, 1]} : vector<2x128xf32> to vector<2x32xf32>
    %26 = vector.extract_strided_slice %21 {offsets = [0, 96], sizes = [2, 32], strides = [1, 1]} : vector<2x128xf32> to vector<2x32xf32>
    %27 = arith.mulf %24, %12 : vector<2x32xf32>
    %28 = arith.mulf %23, %25 : vector<2x32xf32>
    %29 = arith.addf %27, %28 : vector<2x32xf32>
    %30 = math.tanh %29 : vector<2x32xf32>
    %31 = arith.mulf %26, %30 : vector<2x32xf32>
    %32 = vector.extract_strided_slice %9 {offsets = [0, 1, 0], sizes = [2, 1, 128], strides = [1, 1, 1]} : vector<2x8x128xf32> to vector<2x1x128xf32>
    %33 = vector.shape_cast %32 : vector<2x1x128xf32> to vector<2x128xf32>
    %cst_16 = arith.constant dense<0.000000e+00> : vector<2x128xf32>
    %34 = tpu.matmul %31, %10, %cst_16 {dimension_numbers = #tpu.dot_dimension_numbers<[1], [0], [0], [1], [0, 0, 1, 1], [], []>} : vector<2x32xf32>, vector<32x128xf32>, vector<2x128xf32> -> vector<2x128xf32>
    %35 = arith.addf %33, %34 : vector<2x128xf32>
    %36 = arith.negf %35 : vector<2x128xf32>
    %37 = math.exp %36 : vector<2x128xf32>
    %cst_17 = arith.constant 1.000000e+00 : f32
    %38 = vector.broadcast %cst_17 : f32 to vector<2x128xf32>
    %39 = arith.addf %38, %37 : vector<2x128xf32>
    %40 = arith.divf %38, %39 : vector<2x128xf32>
    %41 = math.tanh %35 : vector<2x128xf32>
    %42 = vector.extract_strided_slice %40 {offsets = [0, 0], sizes = [2, 32], strides = [1, 1]} : vector<2x128xf32> to vector<2x32xf32>
    %43 = vector.extract_strided_slice %40 {offsets = [0, 32], sizes = [2, 32], strides = [1, 1]} : vector<2x128xf32> to vector<2x32xf32>
    %44 = vector.extract_strided_slice %41 {offsets = [0, 64], sizes = [2, 32], strides = [1, 1]} : vector<2x128xf32> to vector<2x32xf32>
    %45 = vector.extract_strided_slice %40 {offsets = [0, 96], sizes = [2, 32], strides = [1, 1]} : vector<2x128xf32> to vector<2x32xf32>
    %46 = arith.mulf %43, %29 : vector<2x32xf32>
    %47 = arith.mulf %42, %44 : vector<2x32xf32>
    %48 = arith.addf %46, %47 : vector<2x32xf32>
    %49 = math.tanh %48 : vector<2x32xf32>
    %50 = arith.mulf %45, %49 : vector<2x32xf32>
    %51 = vector.extract_strided_slice %9 {offsets = [0, 2, 0], sizes = [2, 1, 128], strides = [1, 1, 1]} : vector<2x8x128xf32> to vector<2x1x128xf32>
    %52 = vector.shape_cast %51 : vector<2x1x128xf32> to vector<2x128xf32>
    %cst_18 = arith.constant dense<0.000000e+00> : vector<2x128xf32>
    %53 = tpu.matmul %50, %10, %cst_18 {dimension_numbers = #tpu.dot_dimension_numbers<[1], [0], [0], [1], [0, 0, 1, 1], [], []>} : vector<2x32xf32>, vector<32x128xf32>, vector<2x128xf32> -> vector<2x128xf32>
    %54 = arith.addf %52, %53 : vector<2x128xf32>
    %55 = arith.negf %54 : vector<2x128xf32>
    %56 = math.exp %55 : vector<2x128xf32>
    %cst_19 = arith.constant 1.000000e+00 : f32
    %57 = vector.broadcast %cst_19 : f32 to vector<2x128xf32>
    %58 = arith.addf %57, %56 : vector<2x128xf32>
    %59 = arith.divf %57, %58 : vector<2x128xf32>
    %60 = math.tanh %54 : vector<2x128xf32>
    %61 = vector.extract_strided_slice %59 {offsets = [0, 0], sizes = [2, 32], strides = [1, 1]} : vector<2x128xf32> to vector<2x32xf32>
    %62 = vector.extract_strided_slice %59 {offsets = [0, 32], sizes = [2, 32], strides = [1, 1]} : vector<2x128xf32> to vector<2x32xf32>
    %63 = vector.extract_strided_slice %60 {offsets = [0, 64], sizes = [2, 32], strides = [1, 1]} : vector<2x128xf32> to vector<2x32xf32>
    %64 = vector.extract_strided_slice %59 {offsets = [0, 96], sizes = [2, 32], strides = [1, 1]} : vector<2x128xf32> to vector<2x32xf32>
    %65 = arith.mulf %62, %48 : vector<2x32xf32>
    %66 = arith.mulf %61, %63 : vector<2x32xf32>
    %67 = arith.addf %65, %66 : vector<2x32xf32>
    %68 = math.tanh %67 : vector<2x32xf32>
    %69 = arith.mulf %64, %68 : vector<2x32xf32>
    %70 = vector.extract_strided_slice %9 {offsets = [0, 3, 0], sizes = [2, 1, 128], strides = [1, 1, 1]} : vector<2x8x128xf32> to vector<2x1x128xf32>
    %71 = vector.shape_cast %70 : vector<2x1x128xf32> to vector<2x128xf32>
    %cst_20 = arith.constant dense<0.000000e+00> : vector<2x128xf32>
    %72 = tpu.matmul %69, %10, %cst_20 {dimension_numbers = #tpu.dot_dimension_numbers<[1], [0], [0], [1], [0, 0, 1, 1], [], []>} : vector<2x32xf32>, vector<32x128xf32>, vector<2x128xf32> -> vector<2x128xf32>
    %73 = arith.addf %71, %72 : vector<2x128xf32>
    %74 = arith.negf %73 : vector<2x128xf32>
    %75 = math.exp %74 : vector<2x128xf32>
    %cst_21 = arith.constant 1.000000e+00 : f32
    %76 = vector.broadcast %cst_21 : f32 to vector<2x128xf32>
    %77 = arith.addf %76, %75 : vector<2x128xf32>
    %78 = arith.divf %76, %77 : vector<2x128xf32>
    %79 = math.tanh %73 : vector<2x128xf32>
    %80 = vector.extract_strided_slice %78 {offsets = [0, 0], sizes = [2, 32], strides = [1, 1]} : vector<2x128xf32> to vector<2x32xf32>
    %81 = vector.extract_strided_slice %78 {offsets = [0, 32], sizes = [2, 32], strides = [1, 1]} : vector<2x128xf32> to vector<2x32xf32>
    %82 = vector.extract_strided_slice %79 {offsets = [0, 64], sizes = [2, 32], strides = [1, 1]} : vector<2x128xf32> to vector<2x32xf32>
    %83 = vector.extract_strided_slice %78 {offsets = [0, 96], sizes = [2, 32], strides = [1, 1]} : vector<2x128xf32> to vector<2x32xf32>
    %84 = arith.mulf %81, %67 : vector<2x32xf32>
    %85 = arith.mulf %80, %82 : vector<2x32xf32>
    %86 = arith.addf %84, %85 : vector<2x32xf32>
    %87 = math.tanh %86 : vector<2x32xf32>
    %88 = arith.mulf %83, %87 : vector<2x32xf32>
    %89 = vector.extract_strided_slice %9 {offsets = [0, 4, 0], sizes = [2, 1, 128], strides = [1, 1, 1]} : vector<2x8x128xf32> to vector<2x1x128xf32>
    %90 = vector.shape_cast %89 : vector<2x1x128xf32> to vector<2x128xf32>
    %cst_22 = arith.constant dense<0.000000e+00> : vector<2x128xf32>
    %91 = tpu.matmul %88, %10, %cst_22 {dimension_numbers = #tpu.dot_dimension_numbers<[1], [0], [0], [1], [0, 0, 1, 1], [], []>} : vector<2x32xf32>, vector<32x128xf32>, vector<2x128xf32> -> vector<2x128xf32>
    %92 = arith.addf %90, %91 : vector<2x128xf32>
    %93 = arith.negf %92 : vector<2x128xf32>
    %94 = math.exp %93 : vector<2x128xf32>
    %cst_23 = arith.constant 1.000000e+00 : f32
    %95 = vector.broadcast %cst_23 : f32 to vector<2x128xf32>
    %96 = arith.addf %95, %94 : vector<2x128xf32>
    %97 = arith.divf %95, %96 : vector<2x128xf32>
    %98 = math.tanh %92 : vector<2x128xf32>
    %99 = vector.extract_strided_slice %97 {offsets = [0, 0], sizes = [2, 32], strides = [1, 1]} : vector<2x128xf32> to vector<2x32xf32>
    %100 = vector.extract_strided_slice %97 {offsets = [0, 32], sizes = [2, 32], strides = [1, 1]} : vector<2x128xf32> to vector<2x32xf32>
    %101 = vector.extract_strided_slice %98 {offsets = [0, 64], sizes = [2, 32], strides = [1, 1]} : vector<2x128xf32> to vector<2x32xf32>
    %102 = vector.extract_strided_slice %97 {offsets = [0, 96], sizes = [2, 32], strides = [1, 1]} : vector<2x128xf32> to vector<2x32xf32>
    %103 = arith.mulf %100, %86 : vector<2x32xf32>
    %104 = arith.mulf %99, %101 : vector<2x32xf32>
    %105 = arith.addf %103, %104 : vector<2x32xf32>
    %106 = math.tanh %105 : vector<2x32xf32>
    %107 = arith.mulf %102, %106 : vector<2x32xf32>
    %108 = vector.extract_strided_slice %9 {offsets = [0, 5, 0], sizes = [2, 1, 128], strides = [1, 1, 1]} : vector<2x8x128xf32> to vector<2x1x128xf32>
    %109 = vector.shape_cast %108 : vector<2x1x128xf32> to vector<2x128xf32>
    %cst_24 = arith.constant dense<0.000000e+00> : vector<2x128xf32>
    %110 = tpu.matmul %107, %10, %cst_24 {dimension_numbers = #tpu.dot_dimension_numbers<[1], [0], [0], [1], [0, 0, 1, 1], [], []>} : vector<2x32xf32>, vector<32x128xf32>, vector<2x128xf32> -> vector<2x128xf32>
    %111 = arith.addf %109, %110 : vector<2x128xf32>
    %112 = arith.negf %111 : vector<2x128xf32>
    %113 = math.exp %112 : vector<2x128xf32>
    %cst_25 = arith.constant 1.000000e+00 : f32
    %114 = vector.broadcast %cst_25 : f32 to vector<2x128xf32>
    %115 = arith.addf %114, %113 : vector<2x128xf32>
    %116 = arith.divf %114, %115 : vector<2x128xf32>
    %117 = math.tanh %111 : vector<2x128xf32>
    %118 = vector.extract_strided_slice %116 {offsets = [0, 0], sizes = [2, 32], strides = [1, 1]} : vector<2x128xf32> to vector<2x32xf32>
    %119 = vector.extract_strided_slice %116 {offsets = [0, 32], sizes = [2, 32], strides = [1, 1]} : vector<2x128xf32> to vector<2x32xf32>
    %120 = vector.extract_strided_slice %117 {offsets = [0, 64], sizes = [2, 32], strides = [1, 1]} : vector<2x128xf32> to vector<2x32xf32>
    %121 = vector.extract_strided_slice %116 {offsets = [0, 96], sizes = [2, 32], strides = [1, 1]} : vector<2x128xf32> to vector<2x32xf32>
    %122 = arith.mulf %119, %105 : vector<2x32xf32>
    %123 = arith.mulf %118, %120 : vector<2x32xf32>
    %124 = arith.addf %122, %123 : vector<2x32xf32>
    %125 = math.tanh %124 : vector<2x32xf32>
    %126 = arith.mulf %121, %125 : vector<2x32xf32>
    %127 = vector.extract_strided_slice %9 {offsets = [0, 6, 0], sizes = [2, 1, 128], strides = [1, 1, 1]} : vector<2x8x128xf32> to vector<2x1x128xf32>
    %128 = vector.shape_cast %127 : vector<2x1x128xf32> to vector<2x128xf32>
    %cst_26 = arith.constant dense<0.000000e+00> : vector<2x128xf32>
    %129 = tpu.matmul %126, %10, %cst_26 {dimension_numbers = #tpu.dot_dimension_numbers<[1], [0], [0], [1], [0, 0, 1, 1], [], []>} : vector<2x32xf32>, vector<32x128xf32>, vector<2x128xf32> -> vector<2x128xf32>
    %130 = arith.addf %128, %129 : vector<2x128xf32>
    %131 = arith.negf %130 : vector<2x128xf32>
    %132 = math.exp %131 : vector<2x128xf32>
    %cst_27 = arith.constant 1.000000e+00 : f32
    %133 = vector.broadcast %cst_27 : f32 to vector<2x128xf32>
    %134 = arith.addf %133, %132 : vector<2x128xf32>
    %135 = arith.divf %133, %134 : vector<2x128xf32>
    %136 = math.tanh %130 : vector<2x128xf32>
    %137 = vector.extract_strided_slice %135 {offsets = [0, 0], sizes = [2, 32], strides = [1, 1]} : vector<2x128xf32> to vector<2x32xf32>
    %138 = vector.extract_strided_slice %135 {offsets = [0, 32], sizes = [2, 32], strides = [1, 1]} : vector<2x128xf32> to vector<2x32xf32>
    %139 = vector.extract_strided_slice %136 {offsets = [0, 64], sizes = [2, 32], strides = [1, 1]} : vector<2x128xf32> to vector<2x32xf32>
    %140 = vector.extract_strided_slice %135 {offsets = [0, 96], sizes = [2, 32], strides = [1, 1]} : vector<2x128xf32> to vector<2x32xf32>
    %141 = arith.mulf %138, %124 : vector<2x32xf32>
    %142 = arith.mulf %137, %139 : vector<2x32xf32>
    %143 = arith.addf %141, %142 : vector<2x32xf32>
    %144 = math.tanh %143 : vector<2x32xf32>
    %145 = arith.mulf %140, %144 : vector<2x32xf32>
    %146 = vector.extract_strided_slice %9 {offsets = [0, 7, 0], sizes = [2, 1, 128], strides = [1, 1, 1]} : vector<2x8x128xf32> to vector<2x1x128xf32>
    %147 = vector.shape_cast %146 : vector<2x1x128xf32> to vector<2x128xf32>
    %cst_28 = arith.constant dense<0.000000e+00> : vector<2x128xf32>
    %148 = tpu.matmul %145, %10, %cst_28 {dimension_numbers = #tpu.dot_dimension_numbers<[1], [0], [0], [1], [0, 0, 1, 1], [], []>} : vector<2x32xf32>, vector<32x128xf32>, vector<2x128xf32> -> vector<2x128xf32>
    %149 = arith.addf %147, %148 : vector<2x128xf32>
    %150 = arith.negf %149 : vector<2x128xf32>
    %151 = math.exp %150 : vector<2x128xf32>
    %cst_29 = arith.constant 1.000000e+00 : f32
    %152 = vector.broadcast %cst_29 : f32 to vector<2x128xf32>
    %153 = arith.addf %152, %151 : vector<2x128xf32>
    %154 = arith.divf %152, %153 : vector<2x128xf32>
    %155 = math.tanh %149 : vector<2x128xf32>
    %156 = vector.extract_strided_slice %154 {offsets = [0, 0], sizes = [2, 32], strides = [1, 1]} : vector<2x128xf32> to vector<2x32xf32>
    %157 = vector.extract_strided_slice %154 {offsets = [0, 32], sizes = [2, 32], strides = [1, 1]} : vector<2x128xf32> to vector<2x32xf32>
    %158 = vector.extract_strided_slice %155 {offsets = [0, 64], sizes = [2, 32], strides = [1, 1]} : vector<2x128xf32> to vector<2x32xf32>
    %159 = vector.extract_strided_slice %154 {offsets = [0, 96], sizes = [2, 32], strides = [1, 1]} : vector<2x128xf32> to vector<2x32xf32>
    %160 = arith.mulf %157, %143 : vector<2x32xf32>
    %161 = arith.mulf %156, %158 : vector<2x32xf32>
    %162 = arith.addf %160, %161 : vector<2x32xf32>
    %163 = math.tanh %162 : vector<2x32xf32>
    %164 = arith.mulf %159, %163 : vector<2x32xf32>
    %165 = vector.shape_cast %164 : vector<2x32xf32> to vector<2x32x1xf32>
    %166 = vector.shape_cast %2 : vector<2x128xf32> to vector<2x1x128xf32>
    %167 = vector.broadcast %165 : vector<2x32x1xf32> to vector<2x32x128xf32>
    %168 = vector.broadcast %166 : vector<2x1x128xf32> to vector<2x32x128xf32>
    %169 = arith.mulf %167, %168 : vector<2x32x128xf32>
    %c0_30 = arith.constant 0 : index
    %c0_31 = arith.constant 0 : index
    %170 = vector.load %arg7[%c0_30, %c0_31] : memref<1x128xf32, #tpu.memory_space<vmem>>, vector<1x128xf32>
    %171 = vector.shape_cast %170 : vector<1x128xf32> to vector<1x1x128xf32>
    %172 = vector.broadcast %171 : vector<1x1x128xf32> to vector<2x32x128xf32>
    %173 = arith.addf %169, %172 : vector<2x32x128xf32>
    %cst_32 = arith.constant 0.000000e+00 : f32
    %174 = vector.broadcast %cst_32 : f32 to vector<2x32x128xf32>
    %175 = arith.maximumf %173, %174 : vector<2x32x128xf32>
    %c0_33 = arith.constant 0 : index
    %c0_34 = arith.constant 0 : index
    %176 = vector.load %arg8[%c0_33, %c0_34] : memref<1x128xf32, #tpu.memory_space<vmem>>, vector<1x128xf32>
    %177 = vector.shape_cast %176 : vector<1x128xf32> to vector<1x1x128xf32>
    %178 = vector.broadcast %177 : vector<1x1x128xf32> to vector<2x32x128xf32>
    %179 = arith.mulf %175, %178 : vector<2x32x128xf32>
    %cst_35 = arith.constant dense<0.000000e+00> : vector<2x32xf32>
    %180 = vector.multi_reduction <add>, %179, %cst_35 [2] : vector<2x32x128xf32> to vector<2x32xf32>
    %c0_36 = arith.constant 0 : index
    %c0_37 = arith.constant 0 : index
    %181 = vector.load %arg9[%c0_36, %c0_37] : memref<1x1xf32, #tpu.memory_space<vmem>>, vector<1x1xf32>
    %182 = vector.broadcast %181 : vector<1x1xf32> to vector<2x32xf32>
    %183 = arith.addf %180, %182 : vector<2x32xf32>
    %184 = arith.negf %183 : vector<2x32xf32>
    %185 = math.exp %184 : vector<2x32xf32>
    %cst_38 = arith.constant 1.000000e+00 : f32
    %186 = vector.broadcast %cst_38 : f32 to vector<2x32xf32>
    %187 = arith.addf %186, %185 : vector<2x32xf32>
    %188 = arith.divf %186, %187 : vector<2x32xf32>
    %c0_39 = arith.constant 0 : index
    %c0_40 = arith.constant 0 : index
    %189 = vector.load %arg10[%c0_39, %c0_40] : memref<2x32xf32, #tpu.memory_space<vmem>>, vector<2x32xf32>
    tpu.vector_store %arg10[%c0_39, %c0_40], %188 {strides = array<i32>} : memref<2x32xf32, #tpu.memory_space<vmem>>, vector<2x32xf32>,
    return
  }
  func.func @transform_0(%arg0: i32) -> (i32, i32) {
    %c0_i32 = arith.constant 0 : i32
    %c0_i32_0 = arith.constant 0 : i32
    return %arg0, %c0_i32 : i32, i32
  }
  func.func @transform_1(%arg0: i32) -> (i32, i32) {
    %c0_i32 = arith.constant 0 : i32
    %c0_i32_0 = arith.constant 0 : i32
    return %arg0, %c0_i32 : i32, i32
  }
  func.func @transform_2(%arg0: i32) -> (i32, i32) {
    %c0_i32 = arith.constant 0 : i32
    %c0_i32_0 = arith.constant 0 : i32
    %c0_i32_1 = arith.constant 0 : i32
    return %c0_i32, %c0_i32_0 : i32, i32
  }
  func.func @transform_3(%arg0: i32) -> (i32, i32) {
    %c0_i32 = arith.constant 0 : i32
    %c0_i32_0 = arith.constant 0 : i32
    %c0_i32_1 = arith.constant 0 : i32
    return %c0_i32, %c0_i32_0 : i32, i32
  }
  func.func @transform_4(%arg0: i32) -> (i32, i32) {
    %c0_i32 = arith.constant 0 : i32
    %c0_i32_0 = arith.constant 0 : i32
    %c0_i32_1 = arith.constant 0 : i32
    return %c0_i32, %c0_i32_0 : i32, i32
  }
  func.func @transform_5(%arg0: i32) -> (i32, i32) {
    %c0_i32 = arith.constant 0 : i32
    %c0_i32_0 = arith.constant 0 : i32
    %c0_i32_1 = arith.constant 0 : i32
    return %c0_i32, %c0_i32_0 : i32, i32
  }
  func.func @transform_6(%arg0: i32) -> (i32, i32) {
    %c0_i32 = arith.constant 0 : i32
    %c0_i32_0 = arith.constant 0 : i32
    %c0_i32_1 = arith.constant 0 : i32
    return %c0_i32, %c0_i32_0 : i32, i32
  }
  func.func @transform_7(%arg0: i32) -> (i32, i32) {
    %c0_i32 = arith.constant 0 : i32
    %c0_i32_0 = arith.constant 0 : i32
    %c0_i32_1 = arith.constant 0 : i32
    return %c0_i32, %c0_i32_0 : i32, i32
  }
  func.func @transform_8(%arg0: i32) -> (i32, i32) {
    %c0_i32 = arith.constant 0 : i32
    %c0_i32_0 = arith.constant 0 : i32
    %c0_i32_1 = arith.constant 0 : i32
    return %c0_i32, %c0_i32_0 : i32, i32
  }
  func.func @transform_9(%arg0: i32) -> (i32, i32) {
    %c0_i32 = arith.constant 0 : i32
    %c0_i32_0 = arith.constant 0 : i32
    return %arg0, %c0_i32 : i32, i32
  }
}

</mosaic_0001>

<llo_original>
// kernel: transition_predictor_cnn.1
$region0: #{transition_predictor_cnn.1}
  #allocation0 [shape = 'u32[]', space=smem, size = 0x4, offset = 0x4, fixed_abs, tag = 'smem constant byte address 0x4 - core index']
  #allocation1 [shape = 'u32[144,128]{1,0:T(1,128)}', space=vmem, size = 0x12000, scoped, tag = 'internal scratch']
  #allocation2 [shape = 'f32[1,1]{1,0:T(1,128)S(1)}', space=vmem, size = 0x200, scoped, tag = 'scoped memory for transition_predictor_cnn.1']
  %s0 = inlined_call_operand.hbm [shape: f32[16,32], index: 0, kind: input, shape index: {}]
  %s1 = inlined_call_operand.vmem [shape: f32[2,64], index: 1, kind: input, shape index: {}]
  %s2 = inlined_call_operand.hbm [shape: f32[32,128], index: 2, kind: input, shape index: {}]
  %s3 = inlined_call_operand.hbm [shape: f32[32,128], index: 3, kind: input, shape index: {}]
  %s4 = inlined_call_operand.vmem [shape: f32[1,128], index: 4, kind: input, shape index: {}]
  %s5 = inlined_call_operand.hbm [shape: f32[64,128], index: 5, kind: input, shape index: {}]
  %s6 = inlined_call_operand.vmem [shape: f32[1,128], index: 6, kind: input, shape index: {}]
  %s7 = inlined_call_operand.vmem [shape: f32[1,128], index: 7, kind: input, shape index: {}]
  %s8 = inlined_call_operand.<no memory space> [shape: f32[1,1], index: 8, kind: input, shape index: {}]
  %s9 = inlined_call_operand.hbm [shape: f32[2,32], index: 9, kind: output, shape index: {}]
  %s10 = sld [smem:[#allocation0]]
  $region62: #{transition_predictor_cnn.1} parent=0
    _
  %s12 = ssub.s32 1, %s10
  %s13 = scalar_select 0, %s12, %s10
  %v14 = vstv %s8
  %15 = vst [vmem:[#allocation2] sm:$0x1] %v14
  $region1: #{transition_predictor_cnn.1} parent=0
    #allocation3 [shape = 'u8[8192]{0}', space=vmem, size = 0x2000, scoped, tag = 'input window, operand 0, single buffered']
    #allocation4 [shape = 's32[1]{0}', space=sflag, size = 0x4, scoped, tag = 'scoped memory for transition_predictor_cnn.1']
    #allocation5 [shape = 's32[1]{0}', space=sflag, size = 0x4, scoped, tag = 'scoped memory for transition_predictor_cnn.1']
    #allocation6 [shape = 'u8[16384]{0}', space=vmem, size = 0x4000, scoped, tag = 'input window, operand 2, single buffered']
    #allocation7 [shape = 's32[1]{0}', space=sflag, size = 0x4, scoped, tag = 'scoped memory for transition_predictor_cnn.1']
    #allocation8 [shape = 'u8[16384]{0}', space=vmem, size = 0x4000, scoped, tag = 'input window, operand 3, single buffered']
    #allocation9 [shape = 'u8[32768]{0}', space=vmem, size = 0x8000, scoped, tag = 'input window, operand 5, single buffered']
    #allocation10 [shape = 's32[1]{0}', space=sflag, size = 0x4, scoped, tag = 'scoped memory for transition_predictor_cnn.1']
    #allocation11 [shape = 'u8[1024]{0}', space=vmem, size = 0x400, scoped, tag = 'output window, operand 0, single buffered']
    %16 = vsyncpa [#allocation4], 0
    %17 = vsyncpa [#allocation7], 0
    %18 = vsyncpa [#allocation10], 0
    %19 = vsyncpa [#allocation5], 0
    // Predicated region
    $region2: #{transition_predictor_cnn.1} parent=1 // pred_check
      _
    $region3: #{transition_predictor_cnn.1} parent=1 // pred_check_branch
      %21 = sbr.rel (0) target = $region5
    $region4: #{transition_predictor_cnn.1} parent=1 // pred_region
      %s23 = ssub.s32 256, 256
      %24 = vsyncadd [#allocation4], %s23
      %s25 = sshll.u32 [#allocation3], 4
      %s26 = int_to_ptr.vmem [resolvable:$true] %s25
      %31 = dma.hbm_to_vmem [thread:$0]  %s0, 256, %s26, [#allocation4], 128, 128, 8
    $region5: #{transition_predictor_cnn.1} parent=1 // pred_fallthru
      _
    // Predicated region
    $region6: #{transition_predictor_cnn.1} parent=1 // pred_check
      _
    $region7: #{transition_predictor_cnn.1} parent=1 // pred_check_branch
      %33 = sbr.rel (0) target = $region9
    $region8: #{transition_predictor_cnn.1} parent=1 // pred_region
      _
    $region9: #{transition_predictor_cnn.1} parent=1 // pred_fallthru
      _
    // Predicated region
    $region10: #{transition_predictor_cnn.1} parent=1 // pred_check
      _
    $region11: #{transition_predictor_cnn.1} parent=1 // pred_check_branch
      %35 = sbr.rel (0) target = $region13
    $region12: #{transition_predictor_cnn.1} parent=1 // pred_region
      %s37 = ssub.s32 512, 512
      %38 = vsyncadd [#allocation7], %s37
      %s39 = sshll.u32 [#allocation6], 4
      %s40 = int_to_ptr.vmem [resolvable:$true] %s39
      %45 = dma.hbm_to_vmem [thread:$0]  %s2, 512, %s40, [#allocation7], 128, 128, 8
    $region13: #{transition_predictor_cnn.1} parent=1 // pred_fallthru
      _
    // Predicated region
    $region14: #{transition_predictor_cnn.1} parent=1 // pred_check
      _
    $region15: #{transition_predictor_cnn.1} parent=1 // pred_check_branch
      %47 = sbr.rel (0) target = $region17
    $region16: #{transition_predictor_cnn.1} parent=1 // pred_region
      %s49 = ssub.s32 512, 512
      %50 = vsyncadd [#allocation7], %s49
      %s51 = sshll.u32 [#allocation8], 4
      %s52 = int_to_ptr.vmem [resolvable:$true] %s51
      %57 = dma.hbm_to_vmem [thread:$0]  %s3, 512, %s52, [#allocation7], 128, 128, 8
    $region17: #{transition_predictor_cnn.1} parent=1 // pred_fallthru
      _
    // Predicated region
    $region18: #{transition_predictor_cnn.1} parent=1 // pred_check
      _
    $region19: #{transition_predictor_cnn.1} parent=1 // pred_check_branch
      %59 = sbr.rel (0) target = $region21
    $region20: #{transition_predictor_cnn.1} parent=1 // pred_region
      _
    $region21: #{transition_predictor_cnn.1} parent=1 // pred_fallthru
      _
    // Predicated region
    $region22: #{transition_predictor_cnn.1} parent=1 // pred_check
      _
    $region23: #{transition_predictor_cnn.1} parent=1 // pred_check_branch
      %61 = sbr.rel (0) target = $region25
    $region24: #{transition_predictor_cnn.1} parent=1 // pred_region
      %s63 = ssub.s32 1024, 1024
      %64 = vsyncadd [#allocation10], %s63
      %s65 = sshll.u32 [#allocation9], 4
      %s66 = int_to_ptr.vmem [resolvable:$true] %s65
      %71 = dma.hbm_to_vmem [thread:$0]  %s5, 1024, %s66, [#allocation10], 128, 128, 8
    $region25: #{transition_predictor_cnn.1} parent=1 // pred_fallthru
      _
    // Predicated region
    $region26: #{transition_predictor_cnn.1} parent=1 // pred_check
      _
    $region27: #{transition_predictor_cnn.1} parent=1 // pred_check_branch
      %73 = sbr.rel (0) target = $region29
    $region28: #{transition_predictor_cnn.1} parent=1 // pred_region
      _
    $region29: #{transition_predictor_cnn.1} parent=1 // pred_fallthru
      _
    // Predicated region
    $region30: #{transition_predictor_cnn.1} parent=1 // pred_check
      _
    $region31: #{transition_predictor_cnn.1} parent=1 // pred_check_branch
      %75 = sbr.rel (0) target = $region33
    $region32: #{transition_predictor_cnn.1} parent=1 // pred_region
      _
    $region33: #{transition_predictor_cnn.1} parent=1 // pred_fallthru
      _
    // Predicated region
    $region34: #{transition_predictor_cnn.1} parent=1 // pred_check
      _
    $region35: #{transition_predictor_cnn.1} parent=1 // pred_check_branch
      %77 = sbr.rel (0) target = $region37
    $region36: #{transition_predictor_cnn.1} parent=1 // pred_region
      _
    $region37: #{transition_predictor_cnn.1} parent=1 // pred_fallthru
      _
    // Predicated region
    $region38: #{transition_predictor_cnn.1} parent=1 // pred_check
      _
    $region39: #{transition_predictor_cnn.1} parent=1 // pred_check_branch
      %79 = sbr.rel (0) target = $region41
    $region40: #{transition_predictor_cnn.1} parent=1 // pred_region
      %80 = dma.done [#allocation4], 256
    $region41: #{transition_predictor_cnn.1} parent=1 // pred_fallthru
      _
    // Predicated region
    $region42: #{transition_predictor_cnn.1} parent=1 // pred_check
      _
    $region43: #{transition_predictor_cnn.1} parent=1 // pred_check_branch
      %82 = sbr.rel (0) target = $region45
    $region44: #{transition_predictor_cnn.1} parent=1 // pred_region
      %83 = dma.done [#allocation7], 512
    $region45: #{transition_predictor_cnn.1} parent=1 // pred_fallthru
      _
    // Predicated region
    $region46: #{transition_predictor_cnn.1} parent=1 // pred_check
      _
    $region47: #{transition_predictor_cnn.1} parent=1 // pred_check_branch
      %85 = sbr.rel (0) target = $region49
    $region48: #{transition_predictor_cnn.1} parent=1 // pred_region
      %86 = dma.done [#allocation7], 512
    $region49: #{transition_predictor_cnn.1} parent=1 // pred_fallthru
      _
    // Predicated region
    $region50: #{transition_predictor_cnn.1} parent=1 // pred_check
      _
    $region51: #{transition_predictor_cnn.1} parent=1 // pred_check_branch
      %88 = sbr.rel (0) target = $region53
    $region52: #{transition_predictor_cnn.1} parent=1 // pred_region
      %89 = dma.done [#allocation10], 1024
    $region53: #{transition_predictor_cnn.1} parent=1 // pred_fallthru
      _
    %v90 = vld [vmem:[%s1] sm:$0x3]
    %v91 = vld [vmem:[#allocation9] sm:$0xff]
    %v92 = vld [vmem:[#allocation9 + $0x8] sm:$0xff]
    %v93 = vld [vmem:[#allocation9 + $0x10] sm:$0xff]
    %v94 = vld [vmem:[#allocation9 + $0x18] sm:$0xff]
    %v95 = vld [vmem:[#allocation9 + $0x20] sm:$0xff]
    %v96 = vld [vmem:[#allocation9 + $0x28] sm:$0xff]
    %v97 = vld [vmem:[#allocation9 + $0x30] sm:$0xff]
    %v98 = vld [vmem:[#allocation9 + $0x38] sm:$0xff]
    %vm99 = vcmask 523264
    %v101 = vsel %vm99, %v90, 0
    %103 = vmatprep.subr.mxu0 0.0
    %104 = vmatpush1.msra.mxu0 0.0
    %105 = vmatprep.subr.mxu0 0.0
    %106 = vmatpush1.msra.mxu0 0.0
    %107 = vmatprep.subr.mxu0 0.0
    %108 = vmatpush1.msra.mxu0 0.0
    %109 = vmatprep.subr.mxu0 0.0
    %110 = vmatpush1.msra.mxu0 0.0
    %111 = vmatprep.subr.mxu0 0.0
    %112 = vmatpush1.msra.mxu0 0.0
    %113 = vmatprep.subr.mxu0 0.0
    %114 = vmatpush1.msra.mxu0 0.0
    %115 = vmatprep.subr.mxu0 0.0
    %116 = vmatpush1.msra.mxu0 0.0
    %117 = vmatprep.subr.mxu0 0.0
    %118 = vmatpush1.msra.mxu0 0.0
    %119 = vmatprep.subr.mxu0 0.0
    %120 = vmatpush1.msra.mxu0 %v98
    %121 = vmatprep.subr.mxu0 0.0
    %122 = vmatpush1.msra.mxu0 %v97
    %123 = vmatprep.subr.mxu0 0.0
    %124 = vmatpush1.msra.mxu0 %v96
    %125 = vmatprep.subr.mxu0 0.0
    %126 = vmatpush1.msra.mxu0 %v95
    %127 = vmatprep.subr.mxu0 0.0
    %128 = vmatpush1.msra.mxu0 %v94
    %129 = vmatprep.subr.mxu0 0.0
    %130 = vmatpush1.msra.mxu0 %v93
    %131 = vmatprep.subr.mxu0 0.0
    %132 = vmatpush1.msra.mxu0 %v92
    %133 = vmatprep.subr.mxu0 0.0
    %134 = vmatpush1.msra.mxu0 %v91
    %135 = vmatprep.subr.mxu0 0.0
    %136 = vmatpush2.msra.mxu0 0.0
    %137 = vmatprep.subr.mxu0 0.0
    %138 = vmatpush2.msra.mxu0 0.0
    %139 = vmatprep.subr.mxu0 0.0
    %140 = vmatpush2.msra.mxu0 0.0
    %141 = vmatprep.subr.mxu0 0.0
    %142 = vmatpush2.msra.mxu0 0.0
    %143 = vmatprep.subr.mxu0 0.0
    %144 = vmatpush2.msra.mxu0 0.0
    %145 = vmatprep.subr.mxu0 0.0
    %146 = vmatpush2.msra.mxu0 0.0
    %147 = vmatprep.subr.mxu0 0.0
    %148 = vmatpush2.msra.mxu0 0.0
    %149 = vmatprep.subr.mxu0 0.0
    %150 = vmatpush2.msra.mxu0 0.0
    %151 = vmatprep.subr.mxu0 0.0
    %152 = vmatpush2.msra.mxu0 0.0
    %153 = vmatprep.subr.mxu0 0.0
    %154 = vmatpush2.msra.mxu0 0.0
    %155 = vmatprep.subr.mxu0 0.0
    %156 = vmatpush2.msra.mxu0 0.0
    %157 = vmatprep.subr.mxu0 0.0
    %158 = vmatpush2.msra.mxu0 0.0
    %159 = vmatprep.subr.mxu0 0.0
    %160 = vmatpush2.msra.mxu0 0.0
    %161 = vmatprep.subr.mxu0 0.0
    %162 = vmatpush2.msra.mxu0 0.0
    %163 = vmatprep.subr.mxu0 0.0
    %164 = vmatpush2.msra.mxu0 0.0
    %165 = vmatprep.subr.mxu0 0.0
    %166 = vmatpush2.msra.mxu0 0.0
    %167 = vmatprep.mubr.f32.mxu0 0.0
    %168 = vmatmul.mubr.f32.gmra.mxu0 %v101
    %v169 = vpop.f32.mrf.mxu0
    %v170 = vadd.f32 0.0, %v169
    %v171 = vpop.f32.mrf.mxu0
    %172 = vdwg.mxu0
    %v173 = vld [vmem:[#allocation3] sm:$0xff]
    %v174 = vld [vmem:[#allocation3 + $0x8] sm:$0xff]
    %v175 = vld [vmem:[#allocation6] sm:$0xff]
    %v176 = vld [vmem:[#allocation6 + $0x8] sm:$0xff]
    %v177 = vld [vmem:[#allocation6 + $0x10] sm:$0xff]
    %v178 = vld [vmem:[#allocation6 + $0x18] sm:$0xff]
    %v179 = vld [vmem:[%s4] sm:$0x1]
    %v181 = vlaneseq
    %v182 = vshrl.u32 %v181, 7
    %v183 = vsub.s32 0, %v182
    %v184 = vrot.slane %v179, %v183
    %vm186 = vcmask 261120
    %v188 = vsel %vm186, %v173, 0
    %v191 = vsel %vm186, %v174, 0
    %193 = vmatprep.subr.mxu0 0.0
    %194 = vmatpush1.msra.mxu0 0.0
    %195 = vmatprep.subr.mxu0 0.0
    %196 = vmatpush1.msra.mxu0 0.0
    %197 = vmatprep.subr.mxu0 0.0
    %198 = vmatpush1.msra.mxu0 0.0
    %199 = vmatprep.subr.mxu0 0.0
    %200 = vmatpush1.msra.mxu0 0.0
    %201 = vmatprep.subr.mxu0 0.0
    %202 = vmatpush1.msra.mxu0 0.0
    %203 = vmatprep.subr.mxu0 0.0
    %204 = vmatpush1.msra.mxu0 0.0
    %205 = vmatprep.subr.mxu0 0.0
    %206 = vmatpush1.msra.mxu0 0.0
    %207 = vmatprep.subr.mxu0 0.0
    %208 = vmatpush1.msra.mxu0 0.0
    %209 = vmatprep.subr.mxu0 0.0
    %210 = vmatpush1.msra.mxu0 0.0
    %211 = vmatprep.subr.mxu0 0.0
    %212 = vmatpush1.msra.mxu0 0.0
    %213 = vmatprep.subr.mxu0 0.0
    %214 = vmatpush1.msra.mxu0 0.0
    %215 = vmatprep.subr.mxu0 0.0
    %216 = vmatpush1.msra.mxu0 0.0
    %217 = vmatprep.subr.mxu0 0.0
    %218 = vmatpush1.msra.mxu0 %v178
    %219 = vmatprep.subr.mxu0 0.0
    %220 = vmatpush1.msra.mxu0 %v177
    %221 = vmatprep.subr.mxu0 0.0
    %222 = vmatpush1.msra.mxu0 %v176
    %223 = vmatprep.subr.mxu0 0.0
    %224 = vmatpush1.msra.mxu0 %v175
    %225 = vmatprep.subr.mxu0 0.0
    %226 = vmatpush2.msra.mxu0 0.0
    %227 = vmatprep.subr.mxu0 0.0
    %228 = vmatpush2.msra.mxu0 0.0
    %229 = vmatprep.subr.mxu0 0.0
    %230 = vmatpush2.msra.mxu0 0.0
    %231 = vmatprep.subr.mxu0 0.0
    %232 = vmatpush2.msra.mxu0 0.0
    %233 = vmatprep.subr.mxu0 0.0
    %234 = vmatpush2.msra.mxu0 0.0
    %235 = vmatprep.subr.mxu0 0.0
    %236 = vmatpush2.msra.mxu0 0.0
    %237 = vmatprep.subr.mxu0 0.0
    %238 = vmatpush2.msra.mxu0 0.0
    %239 = vmatprep.subr.mxu0 0.0
    %240 = vmatpush2.msra.mxu0 0.0
    %241 = vmatprep.subr.mxu0 0.0
    %242 = vmatpush2.msra.mxu0 0.0
    %243 = vmatprep.subr.mxu0 0.0
    %244 = vmatpush2.msra.mxu0 0.0
    %245 = vmatprep.subr.mxu0 0.0
    %246 = vmatpush2.msra.mxu0 0.0
    %247 = vmatprep.subr.mxu0 0.0
    %248 = vmatpush2.msra.mxu0 0.0
    %249 = vmatprep.subr.mxu0 0.0
    %250 = vmatpush2.msra.mxu0 0.0
    %251 = vmatprep.subr.mxu0 0.0
    %252 = vmatpush2.msra.mxu0 0.0
    %253 = vmatprep.subr.mxu0 0.0
    %254 = vmatpush2.msra.mxu0 0.0
    %255 = vmatprep.subr.mxu0 0.0
    %256 = vmatpush2.msra.mxu0 0.0
    %257 = vmatprep.mubr.f32.mxu0 0.0
    %258 = vmatmul.mubr.f32.gmra.mxu0 %v188
    %v259 = vpop.f32.mrf.mxu0
    %v260 = vadd.f32 %v184, %v259
    %v261 = vpop.f32.mrf.mxu0
    %262 = vmatprep.mubr.f32.mxu0 0.0
    %263 = vmatmul.mubr.f32.gmra.mxu0 %v191
    %v264 = vpop.f32.mrf.mxu0
    %v265 = vadd.f32 %v184, %v264
    %v266 = vpop.f32.mrf.mxu0
    %267 = vdwg.mxu0
    %v268 = vld [vmem:[#allocation8] sm:$0xff]
    %v269 = vld [vmem:[#allocation8 + $0x8] sm:$0xff]
    %v270 = vld [vmem:[#allocation8 + $0x10] sm:$0xff]
    %v271 = vld [vmem:[#allocation8 + $0x18] sm:$0xff]
    %v273 = vsel %vm186, 0.0, 0
    %275 = vmatprep.subr.mxu0 0.0
    %276 = vmatpush1.msra.mxu0 0.0
    %277 = vmatprep.subr.mxu0 0.0
    %278 = vmatpush1.msra.mxu0 0.0
    %279 = vmatprep.subr.mxu0 0.0
    %280 = vmatpush1.msra.mxu0 0.0
    %281 = vmatprep.subr.mxu0 0.0
    %282 = vmatpush1.msra.mxu0 0.0
    %283 = vmatprep.subr.mxu0 0.0
    %284 = vmatpush1.msra.mxu0 0.0
    %285 = vmatprep.subr.mxu0 0.0
    %286 = vmatpush1.msra.mxu0 0.0
    %287 = vmatprep.subr.mxu0 0.0
    %288 = vmatpush1.msra.mxu0 0.0
    %289 = vmatprep.subr.mxu0 0.0
    %290 = vmatpush1.msra.mxu0 0.0
    %291 = vmatprep.subr.mxu0 0.0
    %292 = vmatpush1.msra.mxu0 0.0
    %293 = vmatprep.subr.mxu0 0.0
    %294 = vmatpush1.msra.mxu0 0.0
    %295 = vmatprep.subr.mxu0 0.0
    %296 = vmatpush1.msra.mxu0 0.0
    %297 = vmatprep.subr.mxu0 0.0
    %298 = vmatpush1.msra.mxu0 0.0
    %299 = vmatprep.subr.mxu0 0.0
    %300 = vmatpush1.msra.mxu0 %v271
    %301 = vmatprep.subr.mxu0 0.0
    %302 = vmatpush1.msra.mxu0 %v270
    %303 = vmatprep.subr.mxu0 0.0
    %304 = vmatpush1.msra.mxu0 %v269
    %305 = vmatprep.subr.mxu0 0.0
    %306 = vmatpush1.msra.mxu0 %v268
    %307 = vmatprep.subr.mxu0 0.0
    %308 = vmatpush2.msra.mxu0 0.0
    %309 = vmatprep.subr.mxu0 0.0
    %310 = vmatpush2.msra.mxu0 0.0
    %311 = vmatprep.subr.mxu0 0.0
    %312 = vmatpush2.msra.mxu0 0.0
    %313 = vmatprep.subr.mxu0 0.0
    %314 = vmatpush2.msra.mxu0 0.0
    %315 = vmatprep.subr.mxu0 0.0
    %316 = vmatpush2.msra.mxu0 0.0
    %317 = vmatprep.subr.mxu0 0.0
    %318 = vmatpush2.msra.mxu0 0.0
    %319 = vmatprep.subr.mxu0 0.0
    %320 = vmatpush2.msra.mxu0 0.0
    %321 = vmatprep.subr.mxu0 0.0
    %322 = vmatpush2.msra.mxu0 0.0
    %323 = vmatprep.subr.mxu0 0.0
    %324 = vmatpush2.msra.mxu0 0.0
    %325 = vmatprep.subr.mxu0 0.0
    %326 = vmatpush2.msra.mxu0 0.0
    %327 = vmatprep.subr.mxu0 0.0
    %328 = vmatpush2.msra.mxu0 0.0
    %329 = vmatprep.subr.mxu0 0.0
    %330 = vmatpush2.msra.mxu0 0.0
    %331 = vmatprep.subr.mxu0 0.0
    %332 = vmatpush2.msra.mxu0 0.0
    %333 = vmatprep.subr.mxu0 0.0
    %334 = vmatpush2.msra.mxu0 0.0
    %335 = vmatprep.subr.mxu0 0.0
    %336 = vmatpush2.msra.mxu0 0.0
    %337 = vmatprep.subr.mxu0 0.0
    %338 = vmatpush2.msra.mxu0 0.0
    %339 = vmatprep.mubr.f32.mxu0 0.0
    %340 = vmatmul.mubr.f32.gmra.mxu0 %v273
    %v341 = vpop.f32.mrf.mxu0
    %v342 = vadd.f32 0.0, %v341
    %v343 = vpop.f32.mrf.mxu0
    %344 = vdwg.mxu0
    %v346 = vrot.slane %v342, 1
    %v349 = vadd.f32 %v260, %v342
    %v350 = vadd.f32 %v265, %v346
    %v351 = vxor.u32 %v349, 2147483648
    %v352 = vxor.u32 %v350, 2147483648
    %v353 = vmul.f32 %v351, 1.442695
    %v354 = vpow.pop %v353
    %v355 = vmul.f32 %v352, 1.442695
    %v356 = vpow.pop %v355
    %v357 = vadd.f32 %v354, 1.0
    %v358 = vadd.f32 %v356, 1.0
    %v359 = vrcp.pop %v357
    %v360 = vmul.f32 1.0, %v359
    %v361 = vrcp.pop %v358
    %v362 = vmul.f32 1.0, %v361
    %v363 = vtanh.pop %v349
    %v364 = vtanh.pop %v350
    %v365 = vmul.f32 %v360, 0.0
    %v366 = vmul.f32 %v362, 0.0
    %369 = vrot.lane.b32.xlu0 %v363, 64
    %v370 = vpop.permute.xlu0 %369
    %371 = vrot.lane.b32.xlu0 %v364, 64
    %v372 = vpop.permute.xlu0 %371
    %v375 = vmul.f32 %v360, %v370
    %v376 = vmul.f32 %v362, %v372
    %379 = vrot.lane.b32.xlu0 %v375, 32
    %v380 = vpop.permute.xlu0 %379
    %381 = vrot.lane.b32.xlu0 %v376, 32
    %v382 = vpop.permute.xlu0 %381
    %v385 = vadd.f32 %v365, %v380
    %v386 = vadd.f32 %v366, %v382
    %v387 = vtanh.pop %v385
    %v388 = vtanh.pop %v386
    %391 = vrot.lane.b32.xlu0 %v387, 64
    %v392 = vpop.permute.xlu0 %391
    %393 = vrot.lane.b32.xlu0 %v388, 64
    %v394 = vpop.permute.xlu0 %393
    %v397 = vmul.f32 %v360, %v392
    %v398 = vmul.f32 %v362, %v394
    %v401 = vrot.slane %v398, 7
    %vm402 = vcmask 1041409
    %v403 = vsel %vm402, %v401, %v397
    %404 = vrot.lane.b32.xlu0 %v403, 32
    %v405 = vpop.permute.xlu0 %404
    %v406 = vsel %vm186, %v405, 0
    %408 = vmatprep.subr.mxu0 0.0
    %409 = vmatpush1.msra.mxu0 0.0
    %410 = vmatprep.subr.mxu0 0.0
    %411 = vmatpush1.msra.mxu0 0.0
    %412 = vmatprep.subr.mxu0 0.0
    %413 = vmatpush1.msra.mxu0 0.0
    %414 = vmatprep.subr.mxu0 0.0
    %415 = vmatpush1.msra.mxu0 0.0
    %416 = vmatprep.subr.mxu0 0.0
    %417 = vmatpush1.msra.mxu0 0.0
    %418 = vmatprep.subr.mxu0 0.0
    %419 = vmatpush1.msra.mxu0 0.0
    %420 = vmatprep.subr.mxu0 0.0
    %421 = vmatpush1.msra.mxu0 0.0
    %422 = vmatprep.subr.mxu0 0.0
    %423 = vmatpush1.msra.mxu0 0.0
    %424 = vmatprep.subr.mxu0 0.0
    %425 = vmatpush1.msra.mxu0 0.0
    %426 = vmatprep.subr.mxu0 0.0
    %427 = vmatpush1.msra.mxu0 0.0
    %428 = vmatprep.subr.mxu0 0.0
    %429 = vmatpush1.msra.mxu0 0.0
    %430 = vmatprep.subr.mxu0 0.0
    %431 = vmatpush1.msra.mxu0 0.0
    %432 = vmatprep.subr.mxu0 0.0
    %433 = vmatpush1.msra.mxu0 %v271
    %434 = vmatprep.subr.mxu0 0.0
    %435 = vmatpush1.msra.mxu0 %v270
    %436 = vmatprep.subr.mxu0 0.0
    %437 = vmatpush1.msra.mxu0 %v269
    %438 = vmatprep.subr.mxu0 0.0
    %439 = vmatpush1.msra.mxu0 %v268
    %440 = vmatprep.subr.mxu0 0.0
    %441 = vmatpush2.msra.mxu0 0.0
    %442 = vmatprep.subr.mxu0 0.0
    %443 = vmatpush2.msra.mxu0 0.0
    %444 = vmatprep.subr.mxu0 0.0
    %445 = vmatpush2.msra.mxu0 0.0
    %446 = vmatprep.subr.mxu0 0.0
    %447 = vmatpush2.msra.mxu0 0.0
    %448 = vmatprep.subr.mxu0 0.0
    %449 = vmatpush2.msra.mxu0 0.0
    %450 = vmatprep.subr.mxu0 0.0
    %451 = vmatpush2.msra.mxu0 0.0
    %452 = vmatprep.subr.mxu0 0.0
    %453 = vmatpush2.msra.mxu0 0.0
    %454 = vmatprep.subr.mxu0 0.0
    %455 = vmatpush2.msra.mxu0 0.0
    %456 = vmatprep.subr.mxu0 0.0
    %457 = vmatpush2.msra.mxu0 0.0
    %458 = vmatprep.subr.mxu0 0.0
    %459 = vmatpush2.msra.mxu0 0.0
    %460 = vmatprep.subr.mxu0 0.0
    %461 = vmatpush2.msra.mxu0 0.0
    %462 = vmatprep.subr.mxu0 0.0
    %463 = vmatpush2.msra.mxu0 0.0
    %464 = vmatprep.subr.mxu0 0.0
    %465 = vmatpush2.msra.mxu0 0.0
    %466 = vmatprep.subr.mxu0 0.0
    %467 = vmatpush2.msra.mxu0 0.0
    %468 = vmatprep.subr.mxu0 0.0
    %469 = vmatpush2.msra.mxu0 0.0
    %470 = vmatprep.subr.mxu0 0.0
    %471 = vmatpush2.msra.mxu0 0.0
    %472 = vmatprep.mubr.f32.mxu0 0.0
    %473 = vmatmul.mubr.f32.gmra.mxu0 %v406
    %v474 = vpop.f32.mrf.mxu0
    %v475 = vadd.f32 0.0, %v474
    %v476 = vpop.f32.mrf.mxu0
    %477 = vdwg.mxu0
    %v479 = vrot.slane %v475, 7
    %v482 = vadd.f32 %v260, %v479
    %v483 = vadd.f32 %v265, %v475
    %v484 = vxor.u32 %v482, 2147483648
    %v485 = vxor.u32 %v483, 2147483648
    %v486 = vmul.f32 %v484, 1.442695
    %v487 = vpow.pop %v486
    %v488 = vmul.f32 %v485, 1.442695
    %v489 = vpow.pop %v488
    %v490 = vadd.f32 %v487, 1.0
    %v491 = vadd.f32 %v489, 1.0
    %v492 = vrcp.pop %v490
    %v493 = vmul.f32 1.0, %v492
    %v494 = vrcp.pop %v491
    %v495 = vmul.f32 1.0, %v494
    %v496 = vtanh.pop %v482
    %v497 = vtanh.pop %v483
    %v500 = vrot.slane %v385, 7
    %v501 = vrot.slane %v386, 7
    %v504 = vmul.f32 %v493, %v500
    %v505 = vmul.f32 %v495, %v501
    %508 = vrot.lane.b32.xlu0 %v496, 64
    %v509 = vpop.permute.xlu0 %508
    %510 = vrot.lane.b32.xlu0 %v497, 64
    %v511 = vpop.permute.xlu0 %510
    %v514 = vmul.f32 %v493, %v509
    %v515 = vmul.f32 %v495, %v511
    %518 = vrot.lane.b32.xlu0 %v514, 32
    %v519 = vpop.permute.xlu0 %518
    %520 = vrot.lane.b32.xlu0 %v515, 32
    %v521 = vpop.permute.xlu0 %520
    %v524 = vadd.f32 %v504, %v519
    %v525 = vadd.f32 %v505, %v521
    %v526 = vtanh.pop %v524
    %v527 = vtanh.pop %v525
    %530 = vrot.lane.b32.xlu0 %v526, 64
    %v531 = vpop.permute.xlu0 %530
    %532 = vrot.lane.b32.xlu0 %v527, 64
    %v533 = vpop.permute.xlu0 %532
    %v536 = vmul.f32 %v493, %v531
    %v537 = vmul.f32 %v495, %v533
    %v540 = vrot.slane %v536, 1
    %v541 = vsel %vm402, %v537, %v540
    %542 = vrot.lane.b32.xlu0 %v541, 32
    %v543 = vpop.permute.xlu0 %542
    %v544 = vsel %vm186, %v543, 0
    %546 = vmatprep.subr.mxu0 0.0
    %547 = vmatpush1.msra.mxu0 0.0
    %548 = vmatprep.subr.mxu0 0.0
    %549 = vmatpush1.msra.mxu0 0.0
    %550 = vmatprep.subr.mxu0 0.0
    %551 = vmatpush1.msra.mxu0 0.0
    %552 = vmatprep.subr.mxu0 0.0
    %553 = vmatpush1.msra.mxu0 0.0
    %554 = vmatprep.subr.mxu0 0.0
    %555 = vmatpush1.msra.mxu0 0.0
    %556 = vmatprep.subr.mxu0 0.0
    %557 = vmatpush1.msra.mxu0 0.0
    %558 = vmatprep.subr.mxu0 0.0
    %559 = vmatpush1.msra.mxu0 0.0
    %560 = vmatprep.subr.mxu0 0.0
    %561 = vmatpush1.msra.mxu0 0.0
    %562 = vmatprep.subr.mxu0 0.0
    %563 = vmatpush1.msra.mxu0 0.0
    %564 = vmatprep.subr.mxu0 0.0
    %565 = vmatpush1.msra.mxu0 0.0
    %566 = vmatprep.subr.mxu0 0.0
    %567 = vmatpush1.msra.mxu0 0.0
    %568 = vmatprep.subr.mxu0 0.0
    %569 = vmatpush1.msra.mxu0 0.0
    %570 = vmatprep.subr.mxu0 0.0
    %571 = vmatpush1.msra.mxu0 %v271
    %572 = vmatprep.subr.mxu0 0.0
    %573 = vmatpush1.msra.mxu0 %v270
    %574 = vmatprep.subr.mxu0 0.0
    %575 = vmatpush1.msra.mxu0 %v269
    %576 = vmatprep.subr.mxu0 0.0
    %577 = vmatpush1.msra.mxu0 %v268
    %578 = vmatprep.subr.mxu0 0.0
    %579 = vmatpush2.msra.mxu0 0.0
    %580 = vmatprep.subr.mxu0 0.0
    %581 = vmatpush2.msra.mxu0 0.0
    %582 = vmatprep.subr.mxu0 0.0
    %583 = vmatpush2.msra.mxu0 0.0
    %584 = vmatprep.subr.mxu0 0.0
    %585 = vmatpush2.msra.mxu0 0.0
    %586 = vmatprep.subr.mxu0 0.0
    %587 = vmatpush2.msra.mxu0 0.0
    %588 = vmatprep.subr.mxu0 0.0
    %589 = vmatpush2.msra.mxu0 0.0
    %590 = vmatprep.subr.mxu0 0.0
    %591 = vmatpush2.msra.mxu0 0.0
    %592 = vmatprep.subr.mxu0 0.0
    %593 = vmatpush2.msra.mxu0 0.0
    %594 = vmatprep.subr.mxu0 0.0
    %595 = vmatpush2.msra.mxu0 0.0
    %596 = vmatprep.subr.mxu0 0.0
    %597 = vmatpush2.msra.mxu0 0.0
    %598 = vmatprep.subr.mxu0 0.0
    %599 = vmatpush2.msra.mxu0 0.0
    %600 = vmatprep.subr.mxu0 0.0
    %601 = vmatpush2.msra.mxu0 0.0
    %602 = vmatprep.subr.mxu0 0.0
    %603 = vmatpush2.msra.mxu0 0.0
    %604 = vmatprep.subr.mxu0 0.0
    %605 = vmatpush2.msra.mxu0 0.0
    %606 = vmatprep.subr.mxu0 0.0
    %607 = vmatpush2.msra.mxu0 0.0
    %608 = vmatprep.subr.mxu0 0.0
    %609 = vmatpush2.msra.mxu0 0.0
    %610 = vmatprep.mubr.f32.mxu0 0.0
    %611 = vmatmul.mubr.f32.gmra.mxu0 %v544
    %v612 = vpop.f32.mrf.mxu0
    %v613 = vadd.f32 0.0, %v612
    %v614 = vpop.f32.mrf.mxu0
    %615 = vdwg.mxu0
    %v617 = vrot.slane %v613, 6
    %v618 = vrot.slane %v613, 7
    %v621 = vadd.f32 %v260, %v617
    %v622 = vadd.f32 %v265, %v618
    %v623 = vxor.u32 %v621, 2147483648
    %v624 = vxor.u32 %v622, 2147483648
    %v625 = vmul.f32 %v623, 1.442695
    %v626 = vpow.pop %v625
    %v627 = vmul.f32 %v624, 1.442695
    %v628 = vpow.pop %v627
    %v629 = vadd.f32 %v626, 1.0
    %v630 = vadd.f32 %v628, 1.0
    %v631 = vrcp.pop %v629
    %v632 = vmul.f32 1.0, %v631
    %v633 = vrcp.pop %v630
    %v634 = vmul.f32 1.0, %v633
    %v635 = vtanh.pop %v621
    %v636 = vtanh.pop %v622
    %v639 = vrot.slane %v524, 7
    %v640 = vrot.slane %v525, 7
    %v643 = vmul.f32 %v632, %v639
    %v644 = vmul.f32 %v634, %v640
    %647 = vrot.lane.b32.xlu0 %v635, 64
    %v648 = vpop.permute.xlu0 %647
    %649 = vrot.lane.b32.xlu0 %v636, 64
    %v650 = vpop.permute.xlu0 %649
    %v653 = vmul.f32 %v632, %v648
    %v654 = vmul.f32 %v634, %v650
    %657 = vrot.lane.b32.xlu0 %v653, 32
    %v658 = vpop.permute.xlu0 %657
    %659 = vrot.lane.b32.xlu0 %v654, 32
    %v660 = vpop.permute.xlu0 %659
    %v663 = vadd.f32 %v643, %v658
    %v664 = vadd.f32 %v644, %v660
    %v665 = vtanh.pop %v663
    %v666 = vtanh.pop %v664
    %669 = vrot.lane.b32.xlu0 %v665, 64
    %v670 = vpop.permute.xlu0 %669
    %671 = vrot.lane.b32.xlu0 %v666, 64
    %v672 = vpop.permute.xlu0 %671
    %v675 = vmul.f32 %v632, %v670
    %v676 = vmul.f32 %v634, %v672
    %v679 = vrot.slane %v675, 2
    %v680 = vrot.slane %v676, 1
    %v681 = vsel %vm402, %v680, %v679
    %682 = vrot.lane.b32.xlu0 %v681, 32
    %v683 = vpop.permute.xlu0 %682
    %v684 = vsel %vm186, %v683, 0
    %686 = vmatprep.subr.mxu0 0.0
    %687 = vmatpush1.msra.mxu0 0.0
    %688 = vmatprep.subr.mxu0 0.0
    %689 = vmatpush1.msra.mxu0 0.0
    %690 = vmatprep.subr.mxu0 0.0
    %691 = vmatpush1.msra.mxu0 0.0
    %692 = vmatprep.subr.mxu0 0.0
    %693 = vmatpush1.msra.mxu0 0.0
    %694 = vmatprep.subr.mxu0 0.0
    %695 = vmatpush1.msra.mxu0 0.0
    %696 = vmatprep.subr.mxu0 0.0
    %697 = vmatpush1.msra.mxu0 0.0
    %698 = vmatprep.subr.mxu0 0.0
    %699 = vmatpush1.msra.mxu0 0.0
    %700 = vmatprep.subr.mxu0 0.0
    %701 = vmatpush1.msra.mxu0 0.0
    %702 = vmatprep.subr.mxu0 0.0
    %703 = vmatpush1.msra.mxu0 0.0
    %704 = vmatprep.subr.mxu0 0.0
    %705 = vmatpush1.msra.mxu0 0.0
    %706 = vmatprep.subr.mxu0 0.0
    %707 = vmatpush1.msra.mxu0 0.0
    %708 = vmatprep.subr.mxu0 0.0
    %709 = vmatpush1.msra.mxu0 0.0
    %710 = vmatprep.subr.mxu0 0.0
    %711 = vmatpush1.msra.mxu0 %v271
    %712 = vmatprep.subr.mxu0 0.0
    %713 = vmatpush1.msra.mxu0 %v270
    %714 = vmatprep.subr.mxu0 0.0
    %715 = vmatpush1.msra.mxu0 %v269
    %716 = vmatprep.subr.mxu0 0.0
    %717 = vmatpush1.msra.mxu0 %v268
    %718 = vmatprep.subr.mxu0 0.0
    %719 = vmatpush2.msra.mxu0 0.0
    %720 = vmatprep.subr.mxu0 0.0
    %721 = vmatpush2.msra.mxu0 0.0
    %722 = vmatprep.subr.mxu0 0.0
    %723 = vmatpush2.msra.mxu0 0.0
    %724 = vmatprep.subr.mxu0 0.0
    %725 = vmatpush2.msra.mxu0 0.0
    %726 = vmatprep.subr.mxu0 0.0
    %727 = vmatpush2.msra.mxu0 0.0
    %728 = vmatprep.subr.mxu0 0.0
    %729 = vmatpush2.msra.mxu0 0.0
    %730 = vmatprep.subr.mxu0 0.0
    %731 = vmatpush2.msra.mxu0 0.0
    %732 = vmatprep.subr.mxu0 0.0
    %733 = vmatpush2.msra.mxu0 0.0
    %734 = vmatprep.subr.mxu0 0.0
    %735 = vmatpush2.msra.mxu0 0.0
    %736 = vmatprep.subr.mxu0 0.0
    %737 = vmatpush2.msra.mxu0 0.0
    %738 = vmatprep.subr.mxu0 0.0
    %739 = vmatpush2.msra.mxu0 0.0
    %740 = vmatprep.subr.mxu0 0.0
    %741 = vmatpush2.msra.mxu0 0.0
    %742 = vmatprep.subr.mxu0 0.0
    %743 = vmatpush2.msra.mxu0 0.0
    %744 = vmatprep.subr.mxu0 0.0
    %745 = vmatpush2.msra.mxu0 0.0
    %746 = vmatprep.subr.mxu0 0.0
    %747 = vmatpush2.msra.mxu0 0.0
    %748 = vmatprep.subr.mxu0 0.0
    %749 = vmatpush2.msra.mxu0 0.0
    %750 = vmatprep.mubr.f32.mxu0 0.0
    %751 = vmatmul.mubr.f32.gmra.mxu0 %v684
    %v752 = vpop.f32.mrf.mxu0
    %v753 = vadd.f32 0.0, %v752
    %v754 = vpop.f32.mrf.mxu0
    %755 = vdwg.mxu0
    %v757 = vrot.slane %v753, 5
    %v758 = vrot.slane %v753, 6
    %v761 = vadd.f32 %v260, %v757
    %v762 = vadd.f32 %v265, %v758
    %v763 = vxor.u32 %v761, 2147483648
    %v764 = vxor.u32 %v762, 2147483648
    %v765 = vmul.f32 %v763, 1.442695
    %v766 = vpow.pop %v765
    %v767 = vmul.f32 %v764, 1.442695
    %v768 = vpow.pop %v767
    %v769 = vadd.f32 %v766, 1.0
    %v770 = vadd.f32 %v768, 1.0
    %v771 = vrcp.pop %v769
    %v772 = vmul.f32 1.0, %v771
    %v773 = vrcp.pop %v770
    %v774 = vmul.f32 1.0, %v773
    %v775 = vtanh.pop %v761
    %v776 = vtanh.pop %v762
    %v779 = vrot.slane %v663, 7
    %v780 = vrot.slane %v664, 7
    %v783 = vmul.f32 %v772, %v779
    %v784 = vmul.f32 %v774, %v780
    %787 = vrot.lane.b32.xlu0 %v775, 64
    %v788 = vpop.permute.xlu0 %787
    %789 = vrot.lane.b32.xlu0 %v776, 64
    %v790 = vpop.permute.xlu0 %789
    %v793 = vmul.f32 %v772, %v788
    %v794 = vmul.f32 %v774, %v790
    %797 = vrot.lane.b32.xlu0 %v793, 32
    %v798 = vpop.permute.xlu0 %797
    %799 = vrot.lane.b32.xlu0 %v794, 32
    %v800 = vpop.permute.xlu0 %799
    %v803 = vadd.f32 %v783, %v798
    %v804 = vadd.f32 %v784, %v800
    %v805 = vtanh.pop %v803
    %v806 = vtanh.pop %v804
    %809 = vrot.lane.b32.xlu0 %v805, 64
    %v810 = vpop.permute.xlu0 %809
    %811 = vrot.lane.b32.xlu0 %v806, 64
    %v812 = vpop.permute.xlu0 %811
    %v815 = vmul.f32 %v772, %v810
    %v816 = vmul.f32 %v774, %v812
    %v819 = vrot.slane %v815, 3
    %v820 = vrot.slane %v816, 2
    %v821 = vsel %vm402, %v820, %v819
    %822 = vrot.lane.b32.xlu0 %v821, 32
    %v823 = vpop.permute.xlu0 %822
    %v824 = vsel %vm186, %v823, 0
    %826 = vmatprep.subr.mxu0 0.0
    %827 = vmatpush1.msra.mxu0 0.0
    %828 = vmatprep.subr.mxu0 0.0
    %829 = vmatpush1.msra.mxu0 0.0
    %830 = vmatprep.subr.mxu0 0.0
    %831 = vmatpush1.msra.mxu0 0.0
    %832 = vmatprep.subr.mxu0 0.0
    %833 = vmatpush1.msra.mxu0 0.0
    %834 = vmatprep.subr.mxu0 0.0
    %835 = vmatpush1.msra.mxu0 0.0
    %836 = vmatprep.subr.mxu0 0.0
    %837 = vmatpush1.msra.mxu0 0.0
    %838 = vmatprep.subr.mxu0 0.0
    %839 = vmatpush1.msra.mxu0 0.0
    %840 = vmatprep.subr.mxu0 0.0
    %841 = vmatpush1.msra.mxu0 0.0
    %842 = vmatprep.subr.mxu0 0.0
    %843 = vmatpush1.msra.mxu0 0.0
    %844 = vmatprep.subr.mxu0 0.0
    %845 = vmatpush1.msra.mxu0 0.0
    %846 = vmatprep.subr.mxu0 0.0
    %847 = vmatpush1.msra.mxu0 0.0
    %848 = vmatprep.subr.mxu0 0.0
    %849 = vmatpush1.msra.mxu0 0.0
    %850 = vmatprep.subr.mxu0 0.0
    %851 = vmatpush1.msra.mxu0 %v271
    %852 = vmatprep.subr.mxu0 0.0
    %853 = vmatpush1.msra.mxu0 %v270
    %854 = vmatprep.subr.mxu0 0.0
    %855 = vmatpush1.msra.mxu0 %v269
    %856 = vmatprep.subr.mxu0 0.0
    %857 = vmatpush1.msra.mxu0 %v268
    %858 = vmatprep.subr.mxu0 0.0
    %859 = vmatpush2.msra.mxu0 0.0
    %860 = vmatprep.subr.mxu0 0.0
    %861 = vmatpush2.msra.mxu0 0.0
    %862 = vmatprep.subr.mxu0 0.0
    %863 = vmatpush2.msra.mxu0 0.0
    %864 = vmatprep.subr.mxu0 0.0
    %865 = vmatpush2.msra.mxu0 0.0
    %866 = vmatprep.subr.mxu0 0.0
    %867 = vmatpush2.msra.mxu0 0.0
    %868 = vmatprep.subr.mxu0 0.0
    %869 = vmatpush2.msra.mxu0 0.0
    %870 = vmatprep.subr.mxu0 0.0
    %871 = vmatpush2.msra.mxu0 0.0
    %872 = vmatprep.subr.mxu0 0.0
    %873 = vmatpush2.msra.mxu0 0.0
    %874 = vmatprep.subr.mxu0 0.0
    %875 = vmatpush2.msra.mxu0 0.0
    %876 = vmatprep.subr.mxu0 0.0
    %877 = vmatpush2.msra.mxu0 0.0
    %878 = vmatprep.subr.mxu0 0.0
    %879 = vmatpush2.msra.mxu0 0.0
    %880 = vmatprep.subr.mxu0 0.0
    %881 = vmatpush2.msra.mxu0 0.0
    %882 = vmatprep.subr.mxu0 0.0
    %883 = vmatpush2.msra.mxu0 0.0
    %884 = vmatprep.subr.mxu0 0.0
    %885 = vmatpush2.msra.mxu0 0.0
    %886 = vmatprep.subr.mxu0 0.0
    %887 = vmatpush2.msra.mxu0 0.0
    %888 = vmatprep.subr.mxu0 0.0
    %889 = vmatpush2.msra.mxu0 0.0
    %890 = vmatprep.mubr.f32.mxu0 0.0
    %891 = vmatmul.mubr.f32.gmra.mxu0 %v824
    %v892 = vpop.f32.mrf.mxu0
    %v893 = vadd.f32 0.0, %v892
    %v894 = vpop.f32.mrf.mxu0
    %895 = vdwg.mxu0
    %v897 = vrot.slane %v893, 4
    %v898 = vrot.slane %v893, 5
    %v901 = vadd.f32 %v260, %v897
    %v902 = vadd.f32 %v265, %v898
    %v903 = vxor.u32 %v901, 2147483648
    %v904 = vxor.u32 %v902, 2147483648
    %v905 = vmul.f32 %v903, 1.442695
    %v906 = vpow.pop %v905
    %v907 = vmul.f32 %v904, 1.442695
    %v908 = vpow.pop %v907
    %v909 = vadd.f32 %v906, 1.0
    %v910 = vadd.f32 %v908, 1.0
    %v911 = vrcp.pop %v909
    %v912 = vmul.f32 1.0, %v911
    %v913 = vrcp.pop %v910
    %v914 = vmul.f32 1.0, %v913
    %v915 = vtanh.pop %v901
    %v916 = vtanh.pop %v902
    %v919 = vrot.slane %v803, 7
    %v920 = vrot.slane %v804, 7
    %v923 = vmul.f32 %v912, %v919
    %v924 = vmul.f32 %v914, %v920
    %927 = vrot.lane.b32.xlu0 %v915, 64
    %v928 = vpop.permute.xlu0 %927
    %929 = vrot.lane.b32.xlu0 %v916, 64
    %v930 = vpop.permute.xlu0 %929
    %v933 = vmul.f32 %v912, %v928
    %v934 = vmul.f32 %v914, %v930
    %937 = vrot.lane.b32.xlu0 %v933, 32
    %v938 = vpop.permute.xlu0 %937
    %939 = vrot.lane.b32.xlu0 %v934, 32
    %v940 = vpop.permute.xlu0 %939
    %v943 = vadd.f32 %v923, %v938
    %v944 = vadd.f32 %v924, %v940
    %v945 = vtanh.pop %v943
    %v946 = vtanh.pop %v944
    %949 = vrot.lane.b32.xlu0 %v945, 64
    %v950 = vpop.permute.xlu0 %949
    %951 = vrot.lane.b32.xlu0 %v946, 64
    %v952 = vpop.permute.xlu0 %951
    %v955 = vmul.f32 %v912, %v950
    %v956 = vmul.f32 %v914, %v952
    %v959 = vrot.slane %v955, 4
    %v960 = vrot.slane %v956, 3
    %v961 = vsel %vm402, %v960, %v959
    %962 = vrot.lane.b32.xlu0 %v961, 32
    %v963 = vpop.permute.xlu0 %962
    %v964 = vsel %vm186, %v963, 0
    %966 = vmatprep.subr.mxu0 0.0
    %967 = vmatpush1.msra.mxu0 0.0
    %968 = vmatprep.subr.mxu0 0.0
    %969 = vmatpush1.msra.mxu0 0.0
    %970 = vmatprep.subr.mxu0 0.0
    %971 = vmatpush1.msra.mxu0 0.0
    %972 = vmatprep.subr.mxu0 0.0
    %973 = vmatpush1.msra.mxu0 0.0
    %974 = vmatprep.subr.mxu0 0.0
    %975 = vmatpush1.msra.mxu0 0.0
    %976 = vmatprep.subr.mxu0 0.0
    %977 = vmatpush1.msra.mxu0 0.0
    %978 = vmatprep.subr.mxu0 0.0
    %979 = vmatpush1.msra.mxu0 0.0
    %980 = vmatprep.subr.mxu0 0.0
    %981 = vmatpush1.msra.mxu0 0.0
    %982 = vmatprep.subr.mxu0 0.0
    %983 = vmatpush1.msra.mxu0 0.0
    %984 = vmatprep.subr.mxu0 0.0
    %985 = vmatpush1.msra.mxu0 0.0
    %986 = vmatprep.subr.mxu0 0.0
    %987 = vmatpush1.msra.mxu0 0.0
    %988 = vmatprep.subr.mxu0 0.0
    %989 = vmatpush1.msra.mxu0 0.0
    %990 = vmatprep.subr.mxu0 0.0
    %991 = vmatpush1.msra.mxu0 %v271
    %992 = vmatprep.subr.mxu0 0.0
    %993 = vmatpush1.msra.mxu0 %v270
    %994 = vmatprep.subr.mxu0 0.0
    %995 = vmatpush1.msra.mxu0 %v269
    %996 = vmatprep.subr.mxu0 0.0
    %997 = vmatpush1.msra.mxu0 %v268
    %998 = vmatprep.subr.mxu0 0.0
    %999 = vmatpush2.msra.mxu0 0.0
    %1000 = vmatprep.subr.mxu0 0.0
    %1001 = vmatpush2.msra.mxu0 0.0
    %1002 = vmatprep.subr.mxu0 0.0
    %1003 = vmatpush2.msra.mxu0 0.0
    %1004 = vmatprep.subr.mxu0 0.0
    %1005 = vmatpush2.msra.mxu0 0.0
    %1006 = vmatprep.subr.mxu0 0.0
    %1007 = vmatpush2.msra.mxu0 0.0
    %1008 = vmatprep.subr.mxu0 0.0
    %1009 = vmatpush2.msra.mxu0 0.0
    %1010 = vmatprep.subr.mxu0 0.0
    %1011 = vmatpush2.msra.mxu0 0.0
    %1012 = vmatprep.subr.mxu0 0.0
    %1013 = vmatpush2.msra.mxu0 0.0
    %1014 = vmatprep.subr.mxu0 0.0
    %1015 = vmatpush2.msra.mxu0 0.0
    %1016 = vmatprep.subr.mxu0 0.0
    %1017 = vmatpush2.msra.mxu0 0.0
    %1018 = vmatprep.subr.mxu0 0.0
    %1019 = vmatpush2.msra.mxu0 0.0
    %1020 = vmatprep.subr.mxu0 0.0
    %1021 = vmatpush2.msra.mxu0 0.0
    %1022 = vmatprep.subr.mxu0 0.0
    %1023 = vmatpush2.msra.mxu0 0.0
    %1024 = vmatprep.subr.mxu0 0.0
    %1025 = vmatpush2.msra.mxu0 0.0
    %1026 = vmatprep.subr.mxu0 0.0
    %1027 = vmatpush2.msra.mxu0 0.0
    %1028 = vmatprep.subr.mxu0 0.0
    %1029 = vmatpush2.msra.mxu0 0.0
    %1030 = vmatprep.mubr.f32.mxu0 0.0
    %1031 = vmatmul.mubr.f32.gmra.mxu0 %v964
    %v1032 = vpop.f32.mrf.mxu0
    %v1033 = vadd.f32 0.0, %v1032
    %v1034 = vpop.f32.mrf.mxu0
    %1035 = vdwg.mxu0
    %v1037 = vrot.slane %v1033, 3
    %v1038 = vrot.slane %v1033, 4
    %v1041 = vadd.f32 %v260, %v1037
    %v1042 = vadd.f32 %v265, %v1038
    %v1043 = vxor.u32 %v1041, 2147483648
    %v1044 = vxor.u32 %v1042, 2147483648
    %v1045 = vmul.f32 %v1043, 1.442695
    %v1046 = vpow.pop %v1045
    %v1047 = vmul.f32 %v1044, 1.442695
    %v1048 = vpow.pop %v1047
    %v1049 = vadd.f32 %v1046, 1.0
    %v1050 = vadd.f32 %v1048, 1.0
    %v1051 = vrcp.pop %v1049
    %v1052 = vmul.f32 1.0, %v1051
    %v1053 = vrcp.pop %v1050
    %v1054 = vmul.f32 1.0, %v1053
    %v1055 = vtanh.pop %v1041
    %v1056 = vtanh.pop %v1042
    %v1059 = vrot.slane %v943, 7
    %v1060 = vrot.slane %v944, 7
    %v1063 = vmul.f32 %v1052, %v1059
    %v1064 = vmul.f32 %v1054, %v1060
    %1067 = vrot.lane.b32.xlu0 %v1055, 64
    %v1068 = vpop.permute.xlu0 %1067
    %1069 = vrot.lane.b32.xlu0 %v1056, 64
    %v1070 = vpop.permute.xlu0 %1069
    %v1073 = vmul.f32 %v1052, %v1068
    %v1074 = vmul.f32 %v1054, %v1070
    %1077 = vrot.lane.b32.xlu0 %v1073, 32
    %v1078 = vpop.permute.xlu0 %1077
    %1079 = vrot.lane.b32.xlu0 %v1074, 32
    %v1080 = vpop.permute.xlu0 %1079
    %v1083 = vadd.f32 %v1063, %v1078
    %v1084 = vadd.f32 %v1064, %v1080
    %v1085 = vtanh.pop %v1083
    %v1086 = vtanh.pop %v1084
    %1089 = vrot.lane.b32.xlu0 %v1085, 64
    %v1090 = vpop.permute.xlu0 %1089
    %1091 = vrot.lane.b32.xlu0 %v1086, 64
    %v1092 = vpop.permute.xlu0 %1091
    %v1095 = vmul.f32 %v1052, %v1090
    %v1096 = vmul.f32 %v1054, %v1092
    %v1099 = vrot.slane %v1095, 5
    %v1100 = vrot.slane %v1096, 4
    %v1101 = vsel %vm402, %v1100, %v1099
    %1102 = vrot.lane.b32.xlu0 %v1101, 32
    %v1103 = vpop.permute.xlu0 %1102
    %v1104 = vsel %vm186, %v1103, 0
    %1106 = vmatprep.subr.mxu0 0.0
    %1107 = vmatpush1.msra.mxu0 0.0
    %1108 = vmatprep.subr.mxu0 0.0
    %1109 = vmatpush1.msra.mxu0 0.0
    %1110 = vmatprep.subr.mxu0 0.0
    %1111 = vmatpush1.msra.mxu0 0.0
    %1112 = vmatprep.subr.mxu0 0.0
    %1113 = vmatpush1.msra.mxu0 0.0
    %1114 = vmatprep.subr.mxu0 0.0
    %1115 = vmatpush1.msra.mxu0 0.0
    %1116 = vmatprep.subr.mxu0 0.0
    %1117 = vmatpush1.msra.mxu0 0.0
    %1118 = vmatprep.subr.mxu0 0.0
    %1119 = vmatpush1.msra.mxu0 0.0
    %1120 = vmatprep.subr.mxu0 0.0
    %1121 = vmatpush1.msra.mxu0 0.0
    %1122 = vmatprep.subr.mxu0 0.0
    %1123 = vmatpush1.msra.mxu0 0.0
    %1124 = vmatprep.subr.mxu0 0.0
    %1125 = vmatpush1.msra.mxu0 0.0
    %1126 = vmatprep.subr.mxu0 0.0
    %1127 = vmatpush1.msra.mxu0 0.0
    %1128 = vmatprep.subr.mxu0 0.0
    %1129 = vmatpush1.msra.mxu0 0.0
    %1130 = vmatprep.subr.mxu0 0.0
    %1131 = vmatpush1.msra.mxu0 %v271
    %1132 = vmatprep.subr.mxu0 0.0
    %1133 = vmatpush1.msra.mxu0 %v270
    %1134 = vmatprep.subr.mxu0 0.0
    %1135 = vmatpush1.msra.mxu0 %v269
    %1136 = vmatprep.subr.mxu0 0.0
    %1137 = vmatpush1.msra.mxu0 %v268
    %1138 = vmatprep.subr.mxu0 0.0
    %1139 = vmatpush2.msra.mxu0 0.0
    %1140 = vmatprep.subr.mxu0 0.0
    %1141 = vmatpush2.msra.mxu0 0.0
    %1142 = vmatprep.subr.mxu0 0.0
    %1143 = vmatpush2.msra.mxu0 0.0
    %1144 = vmatprep.subr.mxu0 0.0
    %1145 = vmatpush2.msra.mxu0 0.0
    %1146 = vmatprep.subr.mxu0 0.0
    %1147 = vmatpush2.msra.mxu0 0.0
    %1148 = vmatprep.subr.mxu0 0.0
    %1149 = vmatpush2.msra.mxu0 0.0
    %1150 = vmatprep.subr.mxu0 0.0
    %1151 = vmatpush2.msra.mxu0 0.0
    %1152 = vmatprep.subr.mxu0 0.0
    %1153 = vmatpush2.msra.mxu0 0.0
    %1154 = vmatprep.subr.mxu0 0.0
    %1155 = vmatpush2.msra.mxu0 0.0
    %1156 = vmatprep.subr.mxu0 0.0
    %1157 = vmatpush2.msra.mxu0 0.0
    %1158 = vmatprep.subr.mxu0 0.0
    %1159 = vmatpush2.msra.mxu0 0.0
    %1160 = vmatprep.subr.mxu0 0.0
    %1161 = vmatpush2.msra.mxu0 0.0
    %1162 = vmatprep.subr.mxu0 0.0
    %1163 = vmatpush2.msra.mxu0 0.0
    %1164 = vmatprep.subr.mxu0 0.0
    %1165 = vmatpush2.msra.mxu0 0.0
    %1166 = vmatprep.subr.mxu0 0.0
    %1167 = vmatpush2.msra.mxu0 0.0
    %1168 = vmatprep.subr.mxu0 0.0
    %1169 = vmatpush2.msra.mxu0 0.0
    %1170 = vmatprep.mubr.f32.mxu0 0.0
    %1171 = vmatmul.mubr.f32.gmra.mxu0 %v1104
    %v1172 = vpop.f32.mrf.mxu0
    %v1173 = vadd.f32 0.0, %v1172
    %v1174 = vpop.f32.mrf.mxu0
    %1175 = vdwg.mxu0
    %v1177 = vrot.slane %v1173, 2
    %v1178 = vrot.slane %v1173, 3
    %v1181 = vadd.f32 %v260, %v1177
    %v1182 = vadd.f32 %v265, %v1178
    %v1183 = vxor.u32 %v1181, 2147483648
    %v1184 = vxor.u32 %v1182, 2147483648
    %v1185 = vmul.f32 %v1183, 1.442695
    %v1186 = vpow.pop %v1185
    %v1187 = vmul.f32 %v1184, 1.442695
    %v1188 = vpow.pop %v1187
    %v1189 = vadd.f32 %v1186, 1.0
    %v1190 = vadd.f32 %v1188, 1.0
    %v1191 = vrcp.pop %v1189
    %v1192 = vmul.f32 1.0, %v1191
    %v1193 = vrcp.pop %v1190
    %v1194 = vmul.f32 1.0, %v1193
    %v1195 = vtanh.pop %v1181
    %v1196 = vtanh.pop %v1182
    %v1199 = vrot.slane %v1083, 7
    %v1200 = vrot.slane %v1084, 7
    %v1203 = vmul.f32 %v1192, %v1199
    %v1204 = vmul.f32 %v1194, %v1200
    %1207 = vrot.lane.b32.xlu0 %v1195, 64
    %v1208 = vpop.permute.xlu0 %1207
    %1209 = vrot.lane.b32.xlu0 %v1196, 64
    %v1210 = vpop.permute.xlu0 %1209
    %v1213 = vmul.f32 %v1192, %v1208
    %v1214 = vmul.f32 %v1194, %v1210
    %1217 = vrot.lane.b32.xlu0 %v1213, 32
    %v1218 = vpop.permute.xlu0 %1217
    %1219 = vrot.lane.b32.xlu0 %v1214, 32
    %v1220 = vpop.permute.xlu0 %1219
    %v1223 = vadd.f32 %v1203, %v1218
    %v1224 = vadd.f32 %v1204, %v1220
    %v1225 = vtanh.pop %v1223
    %v1226 = vtanh.pop %v1224
    %1229 = vrot.lane.b32.xlu0 %v1225, 64
    %v1230 = vpop.permute.xlu0 %1229
    %1231 = vrot.lane.b32.xlu0 %v1226, 64
    %v1232 = vpop.permute.xlu0 %1231
    %v1235 = vmul.f32 %v1192, %v1230
    %v1236 = vmul.f32 %v1194, %v1232
    %v1239 = vrot.slane %v1235, 6
    %v1240 = vrot.slane %v1236, 5
    %v1241 = vsel %vm402, %v1240, %v1239
    %1242 = vrot.lane.b32.xlu0 %v1241, 32
    %v1243 = vpop.permute.xlu0 %1242
    %v1244 = vsel %vm186, %v1243, 0
    %1246 = vmatprep.subr.mxu0 0.0
    %1247 = vmatpush1.msra.mxu0 0.0
    %1248 = vmatprep.subr.mxu0 0.0
    %1249 = vmatpush1.msra.mxu0 0.0
    %1250 = vmatprep.subr.mxu0 0.0
    %1251 = vmatpush1.msra.mxu0 0.0
    %1252 = vmatprep.subr.mxu0 0.0
    %1253 = vmatpush1.msra.mxu0 0.0
    %1254 = vmatprep.subr.mxu0 0.0
    %1255 = vmatpush1.msra.mxu0 0.0
    %1256 = vmatprep.subr.mxu0 0.0
    %1257 = vmatpush1.msra.mxu0 0.0
    %1258 = vmatprep.subr.mxu0 0.0
    %1259 = vmatpush1.msra.mxu0 0.0
    %1260 = vmatprep.subr.mxu0 0.0
    %1261 = vmatpush1.msra.mxu0 0.0
    %1262 = vmatprep.subr.mxu0 0.0
    %1263 = vmatpush1.msra.mxu0 0.0
    %1264 = vmatprep.subr.mxu0 0.0
    %1265 = vmatpush1.msra.mxu0 0.0
    %1266 = vmatprep.subr.mxu0 0.0
    %1267 = vmatpush1.msra.mxu0 0.0
    %1268 = vmatprep.subr.mxu0 0.0
    %1269 = vmatpush1.msra.mxu0 0.0
    %1270 = vmatprep.subr.mxu0 0.0
    %1271 = vmatpush1.msra.mxu0 %v271
    %1272 = vmatprep.subr.mxu0 0.0
    %1273 = vmatpush1.msra.mxu0 %v270
    %1274 = vmatprep.subr.mxu0 0.0
    %1275 = vmatpush1.msra.mxu0 %v269
    %1276 = vmatprep.subr.mxu0 0.0
    %1277 = vmatpush1.msra.mxu0 %v268
    %1278 = vmatprep.subr.mxu0 0.0
    %1279 = vmatpush2.msra.mxu0 0.0
    %1280 = vmatprep.subr.mxu0 0.0
    %1281 = vmatpush2.msra.mxu0 0.0
    %1282 = vmatprep.subr.mxu0 0.0
    %1283 = vmatpush2.msra.mxu0 0.0
    %1284 = vmatprep.subr.mxu0 0.0
    %1285 = vmatpush2.msra.mxu0 0.0
    %1286 = vmatprep.subr.mxu0 0.0
    %1287 = vmatpush2.msra.mxu0 0.0
    %1288 = vmatprep.subr.mxu0 0.0
    %1289 = vmatpush2.msra.mxu0 0.0
    %1290 = vmatprep.subr.mxu0 0.0
    %1291 = vmatpush2.msra.mxu0 0.0
    %1292 = vmatprep.subr.mxu0 0.0
    %1293 = vmatpush2.msra.mxu0 0.0
    %1294 = vmatprep.subr.mxu0 0.0
    %1295 = vmatpush2.msra.mxu0 0.0
    %1296 = vmatprep.subr.mxu0 0.0
    %1297 = vmatpush2.msra.mxu0 0.0
    %1298 = vmatprep.subr.mxu0 0.0
    %1299 = vmatpush2.msra.mxu0 0.0
    %1300 = vmatprep.subr.mxu0 0.0
    %1301 = vmatpush2.msra.mxu0 0.0
    %1302 = vmatprep.subr.mxu0 0.0
    %1303 = vmatpush2.msra.mxu0 0.0
    %1304 = vmatprep.subr.mxu0 0.0
    %1305 = vmatpush2.msra.mxu0 0.0
    %1306 = vmatprep.subr.mxu0 0.0
    %1307 = vmatpush2.msra.mxu0 0.0
    %1308 = vmatprep.subr.mxu0 0.0
    %1309 = vmatpush2.msra.mxu0 0.0
    %1310 = vmatprep.mubr.f32.mxu0 0.0
    %1311 = vmatmul.mubr.f32.gmra.mxu0 %v1244
    %v1312 = vpop.f32.mrf.mxu0
    %v1313 = vadd.f32 0.0, %v1312
    %v1314 = vpop.f32.mrf.mxu0
    %1315 = vdwg.mxu0
    %v1317 = vrot.slane %v1313, 1
    %v1318 = vrot.slane %v1313, 2
    %v1321 = vadd.f32 %v260, %v1317
    %v1322 = vadd.f32 %v265, %v1318
    %v1323 = vxor.u32 %v1321, 2147483648
    %v1324 = vxor.u32 %v1322, 2147483648
    %v1325 = vmul.f32 %v1323, 1.442695
    %v1326 = vpow.pop %v1325
    %v1327 = vmul.f32 %v1324, 1.442695
    %v1328 = vpow.pop %v1327
    %v1329 = vadd.f32 %v1326, 1.0
    %v1330 = vadd.f32 %v1328, 1.0
    %v1331 = vrcp.pop %v1329
    %v1332 = vmul.f32 1.0, %v1331
    %v1333 = vrcp.pop %v1330
    %v1334 = vmul.f32 1.0, %v1333
    %v1335 = vtanh.pop %v1321
    %v1336 = vtanh.pop %v1322
    %v1339 = vrot.slane %v1223, 7
    %v1340 = vrot.slane %v1224, 7
    %v1343 = vmul.f32 %v1332, %v1339
    %v1344 = vmul.f32 %v1334, %v1340
    %1347 = vrot.lane.b32.xlu0 %v1335, 64
    %v1348 = vpop.permute.xlu0 %1347
    %1349 = vrot.lane.b32.xlu0 %v1336, 64
    %v1350 = vpop.permute.xlu0 %1349
    %v1353 = vmul.f32 %v1332, %v1348
    %v1354 = vmul.f32 %v1334, %v1350
    %1357 = vrot.lane.b32.xlu0 %v1353, 32
    %v1358 = vpop.permute.xlu0 %1357
    %1359 = vrot.lane.b32.xlu0 %v1354, 32
    %v1360 = vpop.permute.xlu0 %1359
    %v1363 = vadd.f32 %v1343, %v1358
    %v1364 = vadd.f32 %v1344, %v1360
    %v1365 = vtanh.pop %v1363
    %v1366 = vtanh.pop %v1364
    %1369 = vrot.lane.b32.xlu0 %v1365, 64
    %v1370 = vpop.permute.xlu0 %1369
    %1371 = vrot.lane.b32.xlu0 %v1366, 64
    %v1372 = vpop.permute.xlu0 %1371
    %v1375 = vmul.f32 %v1332, %v1370
    %v1376 = vmul.f32 %v1334, %v1372
    %v1377 = vlaneseq
    %v1378 = vshrl.u32 %v1377, 7
    %v1379 = vsub.s32 7, %v1378
    %v1380 = vrot.slane %v1375, %v1379
    %s1382 = sor.u32 256, 96
    %1383 = vbcast.lane.b32.xlu0 %v1380, %s1382
    %v1384 = vpop.permute.xlu0 %1383
    %s1386 = sor.u32 256, 104
    %1387 = vbcast.lane.b32.xlu0 %v1380, %s1386
    %v1388 = vpop.permute.xlu0 %1387
    %s1390 = sor.u32 256, 112
    %1391 = vbcast.lane.b32.xlu0 %v1380, %s1390
    %v1392 = vpop.permute.xlu0 %1391
    %s1394 = sor.u32 256, 120
    %1395 = vbcast.lane.b32.xlu0 %v1380, %s1394
    %v1396 = vpop.permute.xlu0 %1395
    %v1397 = vlaneseq
    %v1398 = vshrl.u32 %v1397, 7
    %v1399 = vsub.s32 7, %v1398
    %v1400 = vrot.slane %v1376, %v1399
    %s1402 = sor.u32 256, 96
    %1403 = vbcast.lane.b32.xlu0 %v1400, %s1402
    %v1404 = vpop.permute.xlu0 %1403
    %s1406 = sor.u32 256, 104
    %1407 = vbcast.lane.b32.xlu0 %v1400, %s1406
    %v1408 = vpop.permute.xlu0 %1407
    %s1410 = sor.u32 256, 112
    %1411 = vbcast.lane.b32.xlu0 %v1400, %s1410
    %v1412 = vpop.permute.xlu0 %1411
    %s1414 = sor.u32 256, 120
    %1415 = vbcast.lane.b32.xlu0 %v1400, %s1414
    %v1416 = vpop.permute.xlu0 %1415
    %v1419 = vunpack.c.l.s4 1966171168
    %v1420 = vunpack.c.0.s8 %v1419
    %v1421 = vlaneseq
    %v1422 = vshrl.u32 %v1421, 7
    %v1423 = vsub.s32 %v1420, %v1422
    %v1424 = vrot.slane %v170, %v1423
    %v1425 = vcombine.high %v1424, %v1424
    %v1427 = vunpack.c.l.s4 1966171168
    %v1428 = vunpack.c.0.s8 %v1427
    %v1429 = vlaneseq
    %v1430 = vshrl.u32 %v1429, 7
    %v1431 = vsub.s32 %v1428, %v1430
    %v1432 = vrot.slane %v1424, %v1431
    %v1434 = vunpack.c.l.s4 1966171168
    %v1435 = vunpack.c.0.s8 %v1434
    %v1436 = vlaneseq
    %v1437 = vshrl.u32 %v1436, 7
    %v1438 = vsub.s32 %v1435, %v1437
    %v1439 = vrot.slane %v1425, %v1438
    %v1440 = vlaneseq
    %v1441 = vshrl.u32 %v1440, 7
    %v1442 = vsub.s32 0, %v1441
    %v1443 = vrot.slane %v1432, %v1442
    %v1444 = vlaneseq
    %v1445 = vshrl.u32 %v1444, 7
    %v1446 = vsub.s32 0, %v1445
    %v1447 = vrot.slane %v1439, %v1446
    %v1450 = vmul.f32 %v1384, %v1443
    %v1451 = vmul.f32 %v1388, %v1443
    %v1452 = vmul.f32 %v1392, %v1443
    %v1453 = vmul.f32 %v1396, %v1443
    %v1454 = vmul.f32 %v1404, %v1447
    %v1455 = vmul.f32 %v1408, %v1447
    %v1456 = vmul.f32 %v1412, %v1447
    %v1457 = vmul.f32 %v1416, %v1447
    %v1458 = vld [vmem:[%s6] sm:$0x1]
    %v1460 = vlaneseq
    %v1461 = vshrl.u32 %v1460, 7
    %v1462 = vsub.s32 0, %v1461
    %v1463 = vrot.slane %v1458, %v1462
    %v1465 = vadd.f32 %v1450, %v1463
    %v1466 = vadd.f32 %v1451, %v1463
    %v1467 = vadd.f32 %v1452, %v1463
    %v1468 = vadd.f32 %v1453, %v1463
    %v1469 = vadd.f32 %v1454, %v1463
    %v1470 = vadd.f32 %v1455, %v1463
    %v1471 = vadd.f32 %v1456, %v1463
    %v1472 = vadd.f32 %v1457, %v1463
    %v1473 = vmax.f32 %v1465, 0.0
    %v1474 = vmax.f32 %v1466, 0.0
    %v1475 = vmax.f32 %v1467, 0.0
    %v1476 = vmax.f32 %v1468, 0.0
    %v1477 = vmax.f32 %v1469, 0.0
    %v1478 = vmax.f32 %v1470, 0.0
    %v1479 = vmax.f32 %v1471, 0.0
    %v1480 = vmax.f32 %v1472, 0.0
    %v1481 = vld [vmem:[%s7] sm:$0x1]
    %v1483 = vlaneseq
    %v1484 = vshrl.u32 %v1483, 7
    %v1485 = vsub.s32 0, %v1484
    %v1486 = vrot.slane %v1481, %v1485
    %v1488 = vmul.f32 %v1473, %v1486
    %v1489 = vmul.f32 %v1474, %v1486
    %v1490 = vmul.f32 %v1475, %v1486
    %v1491 = vmul.f32 %v1476, %v1486
    %v1492 = vmul.f32 %v1477, %v1486
    %v1493 = vmul.f32 %v1478, %v1486
    %v1494 = vmul.f32 %v1479, %v1486
    %v1495 = vmul.f32 %v1480, %v1486
    %1496 = vadd.xlane.f32.xlu0 %v1488
    %v1497 = vpop.xlane.xlu0 %1496
    %1498 = vadd.xlane.f32.xlu0 %v1489
    %v1499 = vpop.xlane.xlu0 %1498
    %1500 = vadd.xlane.f32.xlu0 %v1490
    %v1501 = vpop.xlane.xlu0 %1500
    %1502 = vadd.xlane.f32.xlu0 %v1491
    %v1503 = vpop.xlane.xlu0 %1502
    %1504 = vadd.xlane.f32.xlu0 %v1492
    %v1505 = vpop.xlane.xlu0 %1504
    %1506 = vadd.xlane.f32.xlu0 %v1493
    %v1507 = vpop.xlane.xlu0 %1506
    %1508 = vadd.xlane.f32.xlu0 %v1494
    %v1509 = vpop.xlane.xlu0 %1508
    %1510 = vadd.xlane.f32.xlu0 %v1495
    %v1511 = vpop.xlane.xlu0 %1510
    %v1512 = vld [vmem:[#allocation2] sm:$0x1]
    %v1514 = vlaneseq
    %v1515 = vshrl.u32 %v1514, 7
    %v1516 = vsub.s32 0, %v1515
    %v1517 = vrot.slane %v1512, %v1516
    %1518 = vset.pattern.permute.xlu0 0
    %1519 = vperm.xlu0 %1518, %v1517
    %v1520 = vpop.permute.xlu0 %1519
    %v1522 = vadd.f32 %v1497, %v1520
    %v1523 = vadd.f32 %v1499, %v1520
    %v1524 = vadd.f32 %v1501, %v1520
    %v1525 = vadd.f32 %v1503, %v1520
    %v1526 = vadd.f32 %v1505, %v1520
    %v1527 = vadd.f32 %v1507, %v1520
    %v1528 = vadd.f32 %v1509, %v1520
    %v1529 = vadd.f32 %v1511, %v1520
    %v1530 = vxor.u32 %v1522, 2147483648
    %v1531 = vxor.u32 %v1523, 2147483648
    %v1532 = vxor.u32 %v1524, 2147483648
    %v1533 = vxor.u32 %v1525, 2147483648
    %v1534 = vxor.u32 %v1526, 2147483648
    %v1535 = vxor.u32 %v1527, 2147483648
    %v1536 = vxor.u32 %v1528, 2147483648
    %v1537 = vxor.u32 %v1529, 2147483648
    %v1538 = vmul.f32 %v1530, 1.442695
    %v1539 = vpow.pop %v1538
    %v1540 = vmul.f32 %v1531, 1.442695
    %v1541 = vpow.pop %v1540
    %v1542 = vmul.f32 %v1532, 1.442695
    %v1543 = vpow.pop %v1542
    %v1544 = vmul.f32 %v1533, 1.442695
    %v1545 = vpow.pop %v1544
    %v1546 = vmul.f32 %v1534, 1.442695
    %v1547 = vpow.pop %v1546
    %v1548 = vmul.f32 %v1535, 1.442695
    %v1549 = vpow.pop %v1548
    %v1550 = vmul.f32 %v1536, 1.442695
    %v1551 = vpow.pop %v1550
    %v1552 = vmul.f32 %v1537, 1.442695
    %v1553 = vpow.pop %v1552
    %v1554 = vadd.f32 %v1539, 1.0
    %v1555 = vadd.f32 %v1541, 1.0
    %v1556 = vadd.f32 %v1543, 1.0
    %v1557 = vadd.f32 %v1545, 1.0
    %v1558 = vadd.f32 %v1547, 1.0
    %v1559 = vadd.f32 %v1549, 1.0
    %v1560 = vadd.f32 %v1551, 1.0
    %v1561 = vadd.f32 %v1553, 1.0
    %v1562 = vrcp.pop %v1554
    %v1563 = vmul.f32 1.0, %v1562
    %v1564 = vrcp.pop %v1555
    %v1565 = vmul.f32 1.0, %v1564
    %v1566 = vrcp.pop %v1556
    %v1567 = vmul.f32 1.0, %v1566
    %v1568 = vrcp.pop %v1557
    %v1569 = vmul.f32 1.0, %v1568
    %v1570 = vrcp.pop %v1558
    %v1571 = vmul.f32 1.0, %v1570
    %v1572 = vrcp.pop %v1559
    %v1573 = vmul.f32 1.0, %v1572
    %v1574 = vrcp.pop %v1560
    %v1575 = vmul.f32 1.0, %v1574
    %v1576 = vrcp.pop %v1561
    %v1577 = vmul.f32 1.0, %v1576
    %v1586 = vlaneseq
    %v1587 = vand.u32 %v1586, 127
    %v1588 = vlaneseq
    %v1589 = vshrl.u32 %v1588, 7
    %v1590 = vsub.s32 %v1587, %v1589
    %v1591 = vrot.slane %v1563, %v1590
    %v1592 = vadd.s32 %v1587, 4294967288
    %v1593 = vlaneseq
    %v1594 = vshrl.u32 %v1593, 7
    %v1595 = vsub.s32 %v1592, %v1594
    %v1596 = vrot.slane %v1565, %v1595
    %vm1597 = vcmask 130112
    %v1598 = vsel %vm1597, %v1596, %v1591
    %v1599 = vadd.s32 %v1587, 4294967280
    %v1600 = vlaneseq
    %v1601 = vshrl.u32 %v1600, 7
    %v1602 = vsub.s32 %v1599, %v1601
    %v1603 = vrot.slane %v1567, %v1602
    %vm1604 = vcmask 195712
    %v1605 = vsel %vm1604, %v1603, %v1598
    %v1606 = vadd.s32 %v1587, 4294967272
    %v1607 = vlaneseq
    %v1608 = vshrl.u32 %v1607, 7
    %v1609 = vsub.s32 %v1606, %v1608
    %v1610 = vrot.slane %v1569, %v1609
    %vm1611 = vcmask 261312
    %v1612 = vsel %vm1611, %v1610, %v1605
    %v1613 = vlaneseq
    %v1614 = vshrl.u32 %v1613, 7
    %v1615 = vsub.s32 %v1587, %v1614
    %v1616 = vrot.slane %v1571, %v1615
    %v1617 = vlaneseq
    %v1618 = vshrl.u32 %v1617, 7
    %v1619 = vsub.s32 %v1592, %v1618
    %v1620 = vrot.slane %v1573, %v1619
    %v1621 = vsel %vm1597, %v1620, %v1616
    %v1622 = vlaneseq
    %v1623 = vshrl.u32 %v1622, 7
    %v1624 = vsub.s32 %v1599, %v1623
    %v1625 = vrot.slane %v1575, %v1624
    %v1626 = vsel %vm1604, %v1625, %v1621
    %v1627 = vlaneseq
    %v1628 = vshrl.u32 %v1627, 7
    %v1629 = vsub.s32 %v1606, %v1628
    %v1630 = vrot.slane %v1577, %v1629
    %v1631 = vsel %vm1611, %v1630, %v1626
    %v1632 = vsel %vm402, %v1631, %v1612
    %vm1634 = vcmask 254976
    %1635 = vst.msk [vmem:[#allocation11] sm:$0x3] %vm1634, %v1632
    // Predicated region
    $region54: #{transition_predictor_cnn.1} parent=1 // pred_check
      _
    $region55: #{transition_predictor_cnn.1} parent=1 // pred_check_branch
      %1637 = sbr.rel (0) target = $region57
    $region56: #{transition_predictor_cnn.1} parent=1 // pred_region
      %s1639 = ssub.s32 32, 32
      %1640 = vsyncadd [#allocation5], %s1639
      %s1642 = sshll.u32 [#allocation11], 4
      %s1643 = int_to_ptr.vmem [resolvable:$true] %s1642
      %1645 = dma.vmem_to_hbm [thread:$0]  %s1643, 32, %s9, [#allocation5]
    $region57: #{transition_predictor_cnn.1} parent=1 // pred_fallthru
      _
    // Predicated region
    $region58: #{transition_predictor_cnn.1} parent=1 // pred_check
      _
    $region59: #{transition_predictor_cnn.1} parent=1 // pred_check_branch
      %1647 = sbr.rel (0) target = $region61
    $region60: #{transition_predictor_cnn.1} parent=1 // pred_region
      %1648 = dma.done [#allocation5], 32
    $region61: #{transition_predictor_cnn.1} parent=1 // pred_fallthru
      _
    %1649 = vsyncpa [#allocation4], 1
    %1650 = vsyncpa [#allocation7], 1
    %1651 = vsyncpa [#allocation10], 1
    %1652 = vsyncpa [#allocation5], 1

</llo_original>
